<compile_context>
chip_gen: v6e
topology: v6e:2x2x1
jax: 0.10.0
libtpu: 0.0.40
codegen_flags: <defaults>
</compile_context>

<pallas_src>
import functools

import jax
import jax.numpy as jnp
import numpy as np
from jax.experimental import pallas as pl
from jax.experimental.pallas import tpu as pltpu

# ---- module "args" (synthetic, small) ---------------------------------------
RBF_DIM = 8            # args.rbf_kernel_dim
HIDDEN = 32            # args.num_hidden_nodes
POOL = 4               # args.rbf_kernel_pool_size
STRIDE = 2             # args.rbf_kernel_pool_stride
SIGMA = 0.1            # fixed buffer in the module
DENOM = 2.0 * SIGMA * SIGMA
EPS = 1e-6
# exp(-(SENTINEL - mu)^2 / DENOM) underflows to exactly 0 in f32, which is
# identical to multiplying the RBF response by a 0/1 doc mask.
MASK_SENTINEL = 1e4


def _round_up(n, m):
    return ((n + m - 1) // m) * m


def _rbf_kernel(x_ref, pool_ref, w1_ref, b1_ref, w2_ref, o_ref, e_ref, *,
                mus, inv_denom):
    """One (D, TM) tile: doc positions on sublanes, rows (b,c,q) on lanes."""
    x = x_ref[...]                                    # (D, TM) f32
    d_dim = x.shape[0]

    # RBF features, one full-lane-width (D, TM) slab per center (K=8, static).
    for k, mu in enumerate(mus):
        diff = x - mu
        e_ref[k * d_dim:(k + 1) * d_dim, :] = jnp.exp(-(diff * diff) * inv_denom)

    # Sum-pool (AvgPool1d * pool_size) over doc windows for all K centers in a
    # single MXU matmul with a block-diagonal 0/1 pooling matrix:
    #   (K*P, K*D) @ (K*D, TM) -> (K*P, TM)
    pooled = jnp.dot(pool_ref[...], e_ref[...],
                     preferred_element_type=jnp.float32)
    feat = jnp.log(pooled + EPS)                      # (K*P, TM)

    # fc layer 1 (K -> HIDDEN) for all P windows at once, then ReLU:
    #   (P*H, K*P) @ (K*P, TM) -> (P*H, TM)
    h = jnp.dot(w1_ref[...], feat,
                preferred_element_type=jnp.float32) + b1_ref[...]
    h = jnp.maximum(h, 0.0)

    # fc layer 2 (HIDDEN -> 1) for all P windows: (P, P*H) @ (P*H, TM) -> (P, TM)
    o = jnp.dot(w2_ref[...], h, preferred_element_type=jnp.float32)

    # Max over windows; b2 is added outside the kernel (it commutes with max).
    o_ref[...] = jnp.max(o, axis=0, keepdims=True)    # (1, TM) lane-dense store


def rbf_kernel_forward(x, mask_d, w1, b1, w2, b2, *, tile_m=1024):
    """Eval-mode forward of RBFKernel.  x: (B,C,Q,D), mask_d: (B,C,D) in {0,1}."""
    B, C, Q, D = x.shape
    K, H = w1.shape
    P = (D - POOL) // STRIDE + 1
    M = B * C * Q

    # --- wrapper-side layout plumbing (cheap, fused XLA ops) ------------------
    # Fold the binary doc mask into x via the sentinel (removes the mask DMA).
    xm = jnp.where(mask_d[:, :, None, :] > 0, x.astype(jnp.float32),
                   MASK_SENTINEL)
    x_t = xm.reshape(M, D).T                           # (D, M): rows on lanes

    # Tile selection: multiple of 128 (lane-dense), large, but keep >=2 grid
    # steps when possible so a v7x megacore has both TensorCores busy.
    tile_m = max(128, _round_up(int(tile_m), 128))
    tile = min(tile_m, max(128, _round_up((M + 1) // 2, 128)))
    m_pad = _round_up(M, tile)
    if m_pad != M:
        x_t = jnp.pad(x_t, ((0, 0), (0, m_pad - M)),
                      constant_values=MASK_SENTINEL)

    # --- fold pooling + per-window MLP into three lane-dense matmuls ---------
    pool_np = np.zeros((P, D), np.float32)
    for p in range(P):
        pool_np[p, p * STRIDE:p * STRIDE + POOL] = 1.0
    poolmat = jnp.asarray(np.kron(np.eye(K, dtype=np.float32), pool_np))  # (K*P, K*D)

    eye_p = jnp.eye(P, dtype=jnp.float32)
    w1big = jnp.einsum('kj,pq->pjkq', w1.astype(jnp.float32), eye_p
                       ).reshape(P * H, K * P)         # (P*H, K*P)
    b1col = jnp.tile(b1.reshape(1, H).astype(jnp.float32), (P, 1)
                     ).reshape(P * H, 1)               # (P*H, 1)
    w2big = jnp.einsum('j,pq->pqj', w2.reshape(-1).astype(jnp.float32), eye_p
                       ).reshape(P, P * H)             # (P, P*H)

    # Fixed RBF centers (non-trainable buffer in the module): compile-time consts.
    mus = tuple(1.0 - 2.0 * i / K for i in range(K))

    kern = functools.partial(_rbf_kernel, mus=mus, inv_denom=1.0 / DENOM)
    # VMEM use is tiny (<~3 MiB even at tile_m=1024), well under every
    # generation's scoped default, so no vmem_limit_bytes override is needed.
    out = pl.pallas_call(
        kern,
        out_shape=jax.ShapeDtypeStruct((1, m_pad), jnp.float32),
        grid_spec=pltpu.PrefetchScalarGridSpec(
            num_scalar_prefetch=0,
            grid=(m_pad // tile,),
            in_specs=[
                pl.BlockSpec((D, tile), lambda i: (0, i)),        # x tile
                pl.BlockSpec((K * P, K * D), lambda i: (0, 0)),   # pooling matrix
                pl.BlockSpec((P * H, K * P), lambda i: (0, 0)),   # W1 (windowed)
                pl.BlockSpec((P * H, 1), lambda i: (0, 0)),       # b1 (windowed)
                pl.BlockSpec((P, P * H), lambda i: (0, 0)),       # W2 (windowed)
            ],
            out_specs=pl.BlockSpec((1, tile), lambda i: (0, i)),
            scratch_shapes=[pltpu.VMEM((K * D, tile), jnp.float32)],
        ),
        compiler_params=pltpu.CompilerParams(
            dimension_semantics=("parallel",)),
    )(x_t, poolmat, w1big, b1col, w2big)

    # b2 commutes with the max over windows; add it here.  Drop padded rows.
    return out[0, :M].reshape(B, C, Q) + b2.reshape(())


def rbf_reference(x, mask_d, w1, b1, w2, b2):
    """Pure-JAX mirror of the PyTorch forward (eval mode)."""
    B, C, Q, D = x.shape
    K = w1.shape[0]
    mus = jnp.array([1.0 - 2.0 * i / K for i in range(K)], jnp.float32)
    y = x[..., None] - mus.reshape(1, 1, 1, 1, K)
    y = jnp.exp(-(y * y) / DENOM)
    y = y * mask_d[:, :, None, :, None]                       # (B,C,Q,D,K)
    P = (D - POOL) // STRIDE + 1
    pooled = jnp.stack(
        [y[:, :, :, p * STRIDE: p * STRIDE + POOL, :].sum(axis=3)
         for p in range(P)], axis=3)                           # (B,C,Q,P,K)
    feat = jnp.log(pooled + EPS)
    hi = jax.lax.Precision.HIGHEST                             # PyTorch Linear is true fp32
    h = jnp.maximum(jnp.einsum('bcqpk,kh->bcqph', feat, w1, precision=hi)
                    + b1.reshape(-1), 0.0)
    o = jnp.einsum('bcqph,hz->bcqpz', h, w2, precision=hi)[..., 0] + b2.reshape(())
    return o.max(axis=3)                                       # (B,C,Q)


if __name__ == "__main__":
    key = jax.random.PRNGKey(0)
    B, C, Q, D = 2, 4, 48, 16
    kx, km, k1, k2, k3, k4 = jax.random.split(key, 6)

    x = jax.random.normal(kx, (B, C, Q, D), jnp.float32)
    mask_d = (jax.random.uniform(km, (B, C, D)) > 0.2).astype(jnp.float32)

    # synthetic fc parameters (Linear(K,H) -> ReLU -> Dropout[eval] -> Linear(H,1))
    w1 = 0.1 * jax.random.normal(k1, (RBF_DIM, HIDDEN), jnp.float32)
    b1 = 0.1 * jax.random.normal(k2, (1, HIDDEN), jnp.float32)
    w2 = 0.1 * jax.random.normal(k3, (HIDDEN, 1), jnp.float32)
    b2 = 0.1 * jax.random.normal(k4, (1, 1), jnp.float32)

    out = jax.block_until_ready(rbf_kernel_forward(x, mask_d, w1, b1, w2, b2))
    ref = rbf_reference(x, mask_d, w1, b1, w2, b2)

    assert out.shape == (B, C, Q), out.shape
    # Tolerance accommodates the TPU MXU's reduced-precision passes for f32
    # matmuls (kernel pools on the MXU, reference pools with exact f32 adds);
    # any algorithmic error would show up as O(0.1-1) differences.
    assert jnp.allclose(out, ref, atol=1e-2, rtol=1e-2), \
        float(jnp.max(jnp.abs(out - ref)))
    print("KERNEL_OK")
</pallas_src>

<mosaic_0001>
module attributes {stable_mosaic.version = 11 : i64} {
  func.func @_rbf_kernel(%arg0: i32, %arg1: memref<16x256xf32, #tpu.memory_space<vmem>>, %arg2: memref<56x128xf32, #tpu.memory_space<vmem>>, %arg3: memref<224x56xf32, #tpu.memory_space<vmem>>, %arg4: memref<224x1xf32, #tpu.memory_space<vmem>>, %arg5: memref<7x224xf32, #tpu.memory_space<vmem>>, %arg6: memref<1x256xf32, #tpu.memory_space<vmem>>, %arg7: memref<128x256xf32, #tpu.memory_space<vmem>>) attributes {dimension_semantics = [#tpu.dimension_semantics<parallel>], iteration_bounds = array<i64: 2>, scalar_prefetch = 0 : i64, scratch_operands = 1 : i64, tpu.core_type = #tpu.core_type<tc>, window_params = [{transform_indices = @transform_0, window_bounds = array<i64: 16, 256>}, {pipeline_mode = #tpu.pipeline_mode<synchronous>, transform_indices = @transform_1, window_bounds = array<i64: 56, 128>}, {pipeline_mode = #tpu.pipeline_mode<synchronous>, transform_indices = @transform_2, window_bounds = array<i64: 224, 56>}, {pipeline_mode = #tpu.pipeline_mode<synchronous>, transform_indices = @transform_3, window_bounds = array<i64: 224, 1>}, {pipeline_mode = #tpu.pipeline_mode<synchronous>, transform_indices = @transform_4, window_bounds = array<i64: 7, 224>}, {transform_indices = @transform_5, window_bounds = array<i64: 1, 256>}]} {
    %c0 = arith.constant 0 : index
    %c0_0 = arith.constant 0 : index
    %0 = vector.load %arg1[%c0, %c0_0] : memref<16x256xf32, #tpu.memory_space<vmem>>, vector<16x256xf32>
    %cst = arith.constant 1.000000e+00 : f32
    %1 = vector.broadcast %cst : f32 to vector<16x256xf32>
    %2 = arith.subf %0, %1 : vector<16x256xf32>
    %3 = arith.mulf %2, %2 : vector<16x256xf32>
    %cst_1 = arith.constant 0.000000e+00 : f32
    %4 = vector.broadcast %cst_1 : f32 to vector<16x256xf32>
    %5 = arith.subf %4, %3 : vector<16x256xf32>
    %cst_2 = arith.constant 5.000000e+01 : f32
    %6 = vector.broadcast %cst_2 : f32 to vector<16x256xf32>
    %7 = arith.mulf %5, %6 : vector<16x256xf32>
    %8 = math.exp %7 : vector<16x256xf32>
    %c0_3 = arith.constant 0 : index
    %c0_4 = arith.constant 0 : index
    %9 = vector.load %arg7[%c0_3, %c0_4] : memref<128x256xf32, #tpu.memory_space<vmem>>, vector<16x256xf32>
    tpu.vector_store %arg7[%c0_3, %c0_4], %8 {strides = array<i32>} : memref<128x256xf32, #tpu.memory_space<vmem>>, vector<16x256xf32>,
    %cst_5 = arith.constant 7.500000e-01 : f32
    %10 = vector.broadcast %cst_5 : f32 to vector<16x256xf32>
    %11 = arith.subf %0, %10 : vector<16x256xf32>
    %12 = arith.mulf %11, %11 : vector<16x256xf32>
    %cst_6 = arith.constant 0.000000e+00 : f32
    %13 = vector.broadcast %cst_6 : f32 to vector<16x256xf32>
    %14 = arith.subf %13, %12 : vector<16x256xf32>
    %cst_7 = arith.constant 5.000000e+01 : f32
    %15 = vector.broadcast %cst_7 : f32 to vector<16x256xf32>
    %16 = arith.mulf %14, %15 : vector<16x256xf32>
    %17 = math.exp %16 : vector<16x256xf32>
    %c16 = arith.constant 16 : index
    %c0_8 = arith.constant 0 : index
    %18 = vector.load %arg7[%c16, %c0_8] : memref<128x256xf32, #tpu.memory_space<vmem>>, vector<16x256xf32>
    tpu.vector_store %arg7[%c16, %c0_8], %17 {strides = array<i32>} : memref<128x256xf32, #tpu.memory_space<vmem>>, vector<16x256xf32>,
    %cst_9 = arith.constant 5.000000e-01 : f32
    %19 = vector.broadcast %cst_9 : f32 to vector<16x256xf32>
    %20 = arith.subf %0, %19 : vector<16x256xf32>
    %21 = arith.mulf %20, %20 : vector<16x256xf32>
    %cst_10 = arith.constant 0.000000e+00 : f32
    %22 = vector.broadcast %cst_10 : f32 to vector<16x256xf32>
    %23 = arith.subf %22, %21 : vector<16x256xf32>
    %cst_11 = arith.constant 5.000000e+01 : f32
    %24 = vector.broadcast %cst_11 : f32 to vector<16x256xf32>
    %25 = arith.mulf %23, %24 : vector<16x256xf32>
    %26 = math.exp %25 : vector<16x256xf32>
    %c32 = arith.constant 32 : index
    %c0_12 = arith.constant 0 : index
    %27 = vector.load %arg7[%c32, %c0_12] : memref<128x256xf32, #tpu.memory_space<vmem>>, vector<16x256xf32>
    tpu.vector_store %arg7[%c32, %c0_12], %26 {strides = array<i32>} : memref<128x256xf32, #tpu.memory_space<vmem>>, vector<16x256xf32>,
    %cst_13 = arith.constant 2.500000e-01 : f32
    %28 = vector.broadcast %cst_13 : f32 to vector<16x256xf32>
    %29 = arith.subf %0, %28 : vector<16x256xf32>
    %30 = arith.mulf %29, %29 : vector<16x256xf32>
    %cst_14 = arith.constant 0.000000e+00 : f32
    %31 = vector.broadcast %cst_14 : f32 to vector<16x256xf32>
    %32 = arith.subf %31, %30 : vector<16x256xf32>
    %cst_15 = arith.constant 5.000000e+01 : f32
    %33 = vector.broadcast %cst_15 : f32 to vector<16x256xf32>
    %34 = arith.mulf %32, %33 : vector<16x256xf32>
    %35 = math.exp %34 : vector<16x256xf32>
    %c48 = arith.constant 48 : index
    %c0_16 = arith.constant 0 : index
    %36 = vector.load %arg7[%c48, %c0_16] : memref<128x256xf32, #tpu.memory_space<vmem>>, vector<16x256xf32>
    tpu.vector_store %arg7[%c48, %c0_16], %35 {strides = array<i32>} : memref<128x256xf32, #tpu.memory_space<vmem>>, vector<16x256xf32>,
    %cst_17 = arith.constant 0.000000e+00 : f32
    %37 = vector.broadcast %cst_17 : f32 to vector<16x256xf32>
    %38 = arith.subf %0, %37 : vector<16x256xf32>
    %39 = arith.mulf %38, %38 : vector<16x256xf32>
    %cst_18 = arith.constant 0.000000e+00 : f32
    %40 = vector.broadcast %cst_18 : f32 to vector<16x256xf32>
    %41 = arith.subf %40, %39 : vector<16x256xf32>
    %cst_19 = arith.constant 5.000000e+01 : f32
    %42 = vector.broadcast %cst_19 : f32 to vector<16x256xf32>
    %43 = arith.mulf %41, %42 : vector<16x256xf32>
    %44 = math.exp %43 : vector<16x256xf32>
    %c64 = arith.constant 64 : index
    %c0_20 = arith.constant 0 : index
    %45 = vector.load %arg7[%c64, %c0_20] : memref<128x256xf32, #tpu.memory_space<vmem>>, vector<16x256xf32>
    tpu.vector_store %arg7[%c64, %c0_20], %44 {strides = array<i32>} : memref<128x256xf32, #tpu.memory_space<vmem>>, vector<16x256xf32>,
    %cst_21 = arith.constant -2.500000e-01 : f32
    %46 = vector.broadcast %cst_21 : f32 to vector<16x256xf32>
    %47 = arith.subf %0, %46 : vector<16x256xf32>
    %48 = arith.mulf %47, %47 : vector<16x256xf32>
    %cst_22 = arith.constant 0.000000e+00 : f32
    %49 = vector.broadcast %cst_22 : f32 to vector<16x256xf32>
    %50 = arith.subf %49, %48 : vector<16x256xf32>
    %cst_23 = arith.constant 5.000000e+01 : f32
    %51 = vector.broadcast %cst_23 : f32 to vector<16x256xf32>
    %52 = arith.mulf %50, %51 : vector<16x256xf32>
    %53 = math.exp %52 : vector<16x256xf32>
    %c80 = arith.constant 80 : index
    %c0_24 = arith.constant 0 : index
    %54 = vector.load %arg7[%c80, %c0_24] : memref<128x256xf32, #tpu.memory_space<vmem>>, vector<16x256xf32>
    tpu.vector_store %arg7[%c80, %c0_24], %53 {strides = array<i32>} : memref<128x256xf32, #tpu.memory_space<vmem>>, vector<16x256xf32>,
    %cst_25 = arith.constant -5.000000e-01 : f32
    %55 = vector.broadcast %cst_25 : f32 to vector<16x256xf32>
    %56 = arith.subf %0, %55 : vector<16x256xf32>
    %57 = arith.mulf %56, %56 : vector<16x256xf32>
    %cst_26 = arith.constant 0.000000e+00 : f32
    %58 = vector.broadcast %cst_26 : f32 to vector<16x256xf32>
    %59 = arith.subf %58, %57 : vector<16x256xf32>
    %cst_27 = arith.constant 5.000000e+01 : f32
    %60 = vector.broadcast %cst_27 : f32 to vector<16x256xf32>
    %61 = arith.mulf %59, %60 : vector<16x256xf32>
    %62 = math.exp %61 : vector<16x256xf32>
    %c96 = arith.constant 96 : index
    %c0_28 = arith.constant 0 : index
    %63 = vector.load %arg7[%c96, %c0_28] : memref<128x256xf32, #tpu.memory_space<vmem>>, vector<16x256xf32>
    tpu.vector_store %arg7[%c96, %c0_28], %62 {strides = array<i32>} : memref<128x256xf32, #tpu.memory_space<vmem>>, vector<16x256xf32>,
    %cst_29 = arith.constant -7.500000e-01 : f32
    %64 = vector.broadcast %cst_29 : f32 to vector<16x256xf32>
    %65 = arith.subf %0, %64 : vector<16x256xf32>
    %66 = arith.mulf %65, %65 : vector<16x256xf32>
    %cst_30 = arith.constant 0.000000e+00 : f32
    %67 = vector.broadcast %cst_30 : f32 to vector<16x256xf32>
    %68 = arith.subf %67, %66 : vector<16x256xf32>
    %cst_31 = arith.constant 5.000000e+01 : f32
    %69 = vector.broadcast %cst_31 : f32 to vector<16x256xf32>
    %70 = arith.mulf %68, %69 : vector<16x256xf32>
    %71 = math.exp %70 : vector<16x256xf32>
    %c112 = arith.constant 112 : index
    %c0_32 = arith.constant 0 : index
    %72 = vector.load %arg7[%c112, %c0_32] : memref<128x256xf32, #tpu.memory_space<vmem>>, vector<16x256xf32>
    tpu.vector_store %arg7[%c112, %c0_32], %71 {strides = array<i32>} : memref<128x256xf32, #tpu.memory_space<vmem>>, vector<16x256xf32>,
    %c0_33 = arith.constant 0 : index
    %c0_34 = arith.constant 0 : index
    %73 = vector.load %arg2[%c0_33, %c0_34] : memref<56x128xf32, #tpu.memory_space<vmem>>, vector<56x128xf32>
    %c0_35 = arith.constant 0 : index
    %c0_36 = arith.constant 0 : index
    %74 = vector.load %arg7[%c0_35, %c0_36] : memref<128x256xf32, #tpu.memory_space<vmem>>, vector<128x256xf32>
    %cst_37 = arith.constant dense<0.000000e+00> : vector<56x256xf32>
    %75 = tpu.matmul %73, %74, %cst_37 {dimension_numbers = #tpu.dot_dimension_numbers<[1], [0], [0], [1], [0, 0, 1, 1], [], []>} : vector<56x128xf32>, vector<128x256xf32>, vector<56x256xf32> -> vector<56x256xf32>
    %cst_38 = arith.constant 9.99999997E-7 : f32
    %76 = vector.broadcast %cst_38 : f32 to vector<56x256xf32>
    %77 = arith.addf %75, %76 : vector<56x256xf32>
    %78 = math.log %77 : vector<56x256xf32>
    %c0_39 = arith.constant 0 : index
    %c0_40 = arith.constant 0 : index
    %79 = vector.load %arg3[%c0_39, %c0_40] : memref<224x56xf32, #tpu.memory_space<vmem>>, vector<224x56xf32>
    %cst_41 = arith.constant dense<0.000000e+00> : vector<224x256xf32>
    %80 = tpu.matmul %79, %78, %cst_41 {dimension_numbers = #tpu.dot_dimension_numbers<[1], [0], [0], [1], [0, 0, 1, 1], [], []>} : vector<224x56xf32>, vector<56x256xf32>, vector<224x256xf32> -> vector<224x256xf32>
    %c0_42 = arith.constant 0 : index
    %c0_43 = arith.constant 0 : index
    %81 = vector.load %arg4[%c0_42, %c0_43] : memref<224x1xf32, #tpu.memory_space<vmem>>, vector<224x1xf32>
    %82 = vector.broadcast %81 : vector<224x1xf32> to vector<224x256xf32>
    %83 = arith.addf %80, %82 : vector<224x256xf32>
    %cst_44 = arith.constant 0.000000e+00 : f32
    %84 = vector.broadcast %cst_44 : f32 to vector<224x256xf32>
    %85 = arith.maximumf %83, %84 : vector<224x256xf32>
    %c0_45 = arith.constant 0 : index
    %c0_46 = arith.constant 0 : index
    %86 = vector.load %arg5[%c0_45, %c0_46] : memref<7x224xf32, #tpu.memory_space<vmem>>, vector<7x224xf32>
    %cst_47 = arith.constant dense<0.000000e+00> : vector<7x256xf32>
    %87 = tpu.matmul %86, %85, %cst_47 {dimension_numbers = #tpu.dot_dimension_numbers<[1], [0], [0], [1], [0, 0, 1, 1], [], []>} : vector<7x224xf32>, vector<224x256xf32>, vector<7x256xf32> -> vector<7x256xf32>
    %cst_48 = arith.constant dense<0xFF800000> : vector<256xf32>
    %88 = vector.multi_reduction <maximumf>, %87, %cst_48 [0] : vector<7x256xf32> to vector<256xf32>
    %89 = vector.shape_cast %88 : vector<256xf32> to vector<1x256xf32>
    %c0_49 = arith.constant 0 : index
    %c0_50 = arith.constant 0 : index
    %90 = vector.load %arg6[%c0_49, %c0_50] : memref<1x256xf32, #tpu.memory_space<vmem>>, vector<1x256xf32>
    tpu.vector_store %arg6[%c0_49, %c0_50], %89 {strides = array<i32>} : memref<1x256xf32, #tpu.memory_space<vmem>>, vector<1x256xf32>,
    return
  }
  func.func @transform_0(%arg0: i32) -> (i32, i32) {
    %c0_i32 = arith.constant 0 : i32
    %c0_i32_0 = arith.constant 0 : i32
    return %c0_i32, %arg0 : i32, i32
  }
  func.func @transform_1(%arg0: i32) -> (i32, i32) {
    %c0_i32 = arith.constant 0 : i32
    %c0_i32_0 = arith.constant 0 : i32
    %c0_i32_1 = arith.constant 0 : i32
    return %c0_i32, %c0_i32_0 : i32, i32
  }
  func.func @transform_2(%arg0: i32) -> (i32, i32) {
    %c0_i32 = arith.constant 0 : i32
    %c0_i32_0 = arith.constant 0 : i32
    %c0_i32_1 = arith.constant 0 : i32
    return %c0_i32, %c0_i32_0 : i32, i32
  }
  func.func @transform_3(%arg0: i32) -> (i32, i32) {
    %c0_i32 = arith.constant 0 : i32
    %c0_i32_0 = arith.constant 0 : i32
    %c0_i32_1 = arith.constant 0 : i32
    return %c0_i32, %c0_i32_0 : i32, i32
  }
  func.func @transform_4(%arg0: i32) -> (i32, i32) {
    %c0_i32 = arith.constant 0 : i32
    %c0_i32_0 = arith.constant 0 : i32
    %c0_i32_1 = arith.constant 0 : i32
    return %c0_i32, %c0_i32_0 : i32, i32
  }
  func.func @transform_5(%arg0: i32) -> (i32, i32) {
    %c0_i32 = arith.constant 0 : i32
    %c0_i32_0 = arith.constant 0 : i32
    return %c0_i32, %arg0 : i32, i32
  }
}

</mosaic_0001>

<llo_original>
// kernel: tpu_custom_call.1
$region0: #{tpu_custom_call.1}
  #allocation0 [shape = 'u32[]', space=smem, size = 0x4, offset = 0x4, fixed_abs, tag = 'smem constant byte address 0x4 - core index']
  #allocation1 [shape = 'u32[144,128]{1,0:T(1,128)}', space=vmem, size = 0x12000, scoped, tag = 'internal scratch']
  #allocation2 [shape = 'f32[128,256]{1,0:T(8,128)}', space=vmem, size = 0x20000, scoped, tag = 'scratch operand']
  %s0 = inlined_call_operand.vmem [shape: f32[16,512], index: 0, kind: input, shape index: {}]
  %s1 = inlined_call_operand.vmem [shape: f32[56,128], index: 1, kind: input, shape index: {}]
  %s2 = inlined_call_operand.vmem [shape: f32[224,56], index: 2, kind: input, shape index: {}]
  %s3 = inlined_call_operand.vmem [shape: f32[224,1], index: 3, kind: input, shape index: {}]
  %s4 = inlined_call_operand.vmem [shape: f32[7,224], index: 4, kind: input, shape index: {}]
  %s5 = inlined_call_operand.hbm [shape: f32[1,512], index: 5, kind: output, shape index: {}]
  %s6 = sld [smem:[#allocation0]]
  $region76: #{tpu_custom_call.1} parent=0
    _
  %s8 = ssub.s32 1, %s6
  %s9 = scalar_select 0, %s8, %s6
  $region1: #{tpu_custom_call.1} parent=0
    #allocation3 [shape = 'u8[32768]{0}', space=vmem, size = 0x8000, scoped, tag = 'input window, operand 0']
    #allocation4 [shape = 'u8[2048]{0}', space=vmem, size = 0x800, scoped, tag = 'output window, operand 0']
    #allocation5 [shape = 's32[2]{0}', space=sflag, size = 0x8, scoped, tag = 'scoped memory for tpu_custom_call.1']
    %10 = vsyncpa [#allocation5], 0
    %s11 = scalar_lea.sflag [#allocation5], 1
    %12 = vsyncpa %s11, 0
    loop: start=0, step=1, limit=4
    $region2: #{tpu_custom_call.1} parent=1 // loop_pre_header
      _
    $region3: #{tpu_custom_call.1} parent=1 // loop_header
      %s14 = sphi 0, %s18
      %p15 = scmp.ge.s32.totalorder %s14, 4
      %s24 = sphi 0, %s26
      %s27 = sphi 0, %s24
      %s28 = sphi 0, %s27
      %s44 = sphi 0, %s28
      %s48 = sphi 0, %s48
      %s50 = sphi 0, %s48
      %s51 = sphi 0, %s50
      %s65 = sphi 0, %s51
      %s69 = sphi 0, %s69
      %s71 = sphi 0, %s69
      %s72 = sphi 0, %s71
      %s86 = sphi 0, %s72
      %s90 = sphi 0, %s90
      %s92 = sphi 0, %s90
      %s93 = sphi 0, %s92
      %s107 = sphi 0, %s93
      %s111 = sphi 0, %s111
      %s113 = sphi 0, %s111
      %s114 = sphi 0, %s113
      %s128 = sphi 0, %s114
      %s134 = sphi 0, %s136
      %s137 = sphi 0, %s134
      %s138 = sphi 0, %s137
      %s154 = sphi 0, %s138
    $region4: #{tpu_custom_call.1} parent=1 // loop_header_branch
      %17 = sbr.rel (%p15) target = $region8
    $region5: #{tpu_custom_call.1} parent=1 // loop_body
      %s19 = ssub.s32 %s14, 1
      %s20 = ssub.s32 %s14, 2
      %s21 = sadd.s32 %s14, 1
      %s22 = ssub.s32 %s14, %s21
      %p23 = scmp.eq.s32.totalorder %s22, 0
      %s25 = sadd.s32 %s24, 1
      %s26 = scalar_select %p23, %s24, %s25
      %p29 = pneg %p23
      %p30 = scmp.eq.s32.totalorder %s14, 1
      %p31 = por %p29, %p30
      %p32 = scmp.ne.s32.totalorder %s24, %s27
      %p33 = scmp.eq.s32.totalorder %s14, 0
      %p34 = por %p32, %p33
      %p35 = scmp.ne.s32.totalorder %s24, %s27
      %p36 = scmp.eq.s32.totalorder %s19, 1
      %p37 = por %p35, %p36
      %p38 = scmp.ne.s32.totalorder %s27, %s28
      %p39 = scmp.eq.s32.totalorder %s19, 0
      %p40 = por %p38, %p39
      %p41 = scmp.ne.s32.totalorder %s27, %s28
      %p42 = scmp.eq.s32.totalorder %s20, 1
      %p43 = por %p41, %p42
      %p45 = scmp.ne.s32.totalorder %s28, %s44
      %p46 = scmp.eq.s32.totalorder %s20, 0
      %p47 = por %p45, %p46
      %s49 = sadd.s32 %s48, 1
      %p52 = scmp.eq.s32.totalorder %s14, 1
      %p53 = scmp.ne.s32.totalorder %s48, %s50
      %p54 = scmp.eq.s32.totalorder %s14, 0
      %p55 = por %p53, %p54
      %p56 = scmp.ne.s32.totalorder %s48, %s50
      %p57 = scmp.eq.s32.totalorder %s19, 1
      %p58 = por %p56, %p57
      %p59 = scmp.ne.s32.totalorder %s50, %s51
      %p60 = scmp.eq.s32.totalorder %s19, 0
      %p61 = por %p59, %p60
      %p62 = scmp.ne.s32.totalorder %s50, %s51
      %p63 = scmp.eq.s32.totalorder %s20, 1
      %p64 = por %p62, %p63
      %p66 = scmp.ne.s32.totalorder %s51, %s65
      %p67 = scmp.eq.s32.totalorder %s20, 0
      %p68 = por %p66, %p67
      %s70 = sadd.s32 %s69, 1
      %p73 = scmp.eq.s32.totalorder %s14, 1
      %p74 = scmp.ne.s32.totalorder %s69, %s71
      %p75 = scmp.eq.s32.totalorder %s14, 0
      %p76 = por %p74, %p75
      %p77 = scmp.ne.s32.totalorder %s69, %s71
      %p78 = scmp.eq.s32.totalorder %s19, 1
      %p79 = por %p77, %p78
      %p80 = scmp.ne.s32.totalorder %s71, %s72
      %p81 = scmp.eq.s32.totalorder %s19, 0
      %p82 = por %p80, %p81
      %p83 = scmp.ne.s32.totalorder %s71, %s72
      %p84 = scmp.eq.s32.totalorder %s20, 1
      %p85 = por %p83, %p84
      %p87 = scmp.ne.s32.totalorder %s72, %s86
      %p88 = scmp.eq.s32.totalorder %s20, 0
      %p89 = por %p87, %p88
      %s91 = sadd.s32 %s90, 1
      %p94 = scmp.eq.s32.totalorder %s14, 1
      %p95 = scmp.ne.s32.totalorder %s90, %s92
      %p96 = scmp.eq.s32.totalorder %s14, 0
      %p97 = por %p95, %p96
      %p98 = scmp.ne.s32.totalorder %s90, %s92
      %p99 = scmp.eq.s32.totalorder %s19, 1
      %p100 = por %p98, %p99
      %p101 = scmp.ne.s32.totalorder %s92, %s93
      %p102 = scmp.eq.s32.totalorder %s19, 0
      %p103 = por %p101, %p102
      %p104 = scmp.ne.s32.totalorder %s92, %s93
      %p105 = scmp.eq.s32.totalorder %s20, 1
      %p106 = por %p104, %p105
      %p108 = scmp.ne.s32.totalorder %s93, %s107
      %p109 = scmp.eq.s32.totalorder %s20, 0
      %p110 = por %p108, %p109
      %s112 = sadd.s32 %s111, 1
      %p115 = scmp.eq.s32.totalorder %s14, 1
      %p116 = scmp.ne.s32.totalorder %s111, %s113
      %p117 = scmp.eq.s32.totalorder %s14, 0
      %p118 = por %p116, %p117
      %p119 = scmp.ne.s32.totalorder %s111, %s113
      %p120 = scmp.eq.s32.totalorder %s19, 1
      %p121 = por %p119, %p120
      %p122 = scmp.ne.s32.totalorder %s113, %s114
      %p123 = scmp.eq.s32.totalorder %s19, 0
      %p124 = por %p122, %p123
      %p125 = scmp.ne.s32.totalorder %s113, %s114
      %p126 = scmp.eq.s32.totalorder %s20, 1
      %p127 = por %p125, %p126
      %p129 = scmp.ne.s32.totalorder %s114, %s128
      %p130 = scmp.eq.s32.totalorder %s20, 0
      %p131 = por %p129, %p130
      %s132 = ssub.s32 %s14, %s21
      %p133 = scmp.eq.s32.totalorder %s132, 0
      %s135 = sadd.s32 %s134, 1
      %s136 = scalar_select %p133, %s134, %s135
      %p139 = pneg %p133
      %p140 = scmp.eq.s32.totalorder %s14, 1
      %p141 = por %p139, %p140
      %p142 = scmp.ne.s32.totalorder %s134, %s137
      %p143 = scmp.eq.s32.totalorder %s14, 0
      %p144 = por %p142, %p143
      %p145 = scmp.ne.s32.totalorder %s134, %s137
      %p146 = scmp.eq.s32.totalorder %s19, 1
      %p147 = por %p145, %p146
      %p148 = scmp.ne.s32.totalorder %s137, %s138
      %p149 = scmp.eq.s32.totalorder %s19, 0
      %p150 = por %p148, %p149
      %p151 = scmp.ne.s32.totalorder %s137, %s138
      %p152 = scmp.eq.s32.totalorder %s20, 1
      %p153 = por %p151, %p152
      %p155 = scmp.ne.s32.totalorder %s138, %s154
      %p156 = scmp.eq.s32.totalorder %s20, 0
      %p157 = por %p155, %p156
      %p158 = scmp.le.s32.totalorder 1, %s14
      %p159 = scmp.lt.s32.totalorder %s14, 3
      %p160 = pnand %p158, %p159
      %p161 = pneg %p160
      // Predicated region
      $region9: #{tpu_custom_call.1} parent=5 // pred_check
        _
      $region10: #{tpu_custom_call.1} parent=5 // pred_check_branch
        %163 = sbr.rel (%p160) target = $region12
      $region11: #{tpu_custom_call.1} parent=5 // pred_region
        %s164 = ssub.s32 %s14, 1
        // Predicated region
        $region13: #{tpu_custom_call.1} parent=11 // pred_check
          %p165 = pneg %p61
        $region14: #{tpu_custom_call.1} parent=11 // pred_check_branch
          %167 = sbr.rel (%p165) target = $region16
        $region15: #{tpu_custom_call.1} parent=11 // pred_region
          _
        $region16: #{tpu_custom_call.1} parent=11 // pred_fallthru
          _
        // Predicated region
        $region17: #{tpu_custom_call.1} parent=11 // pred_check
          %p168 = pneg %p82
        $region18: #{tpu_custom_call.1} parent=11 // pred_check_branch
          %170 = sbr.rel (%p168) target = $region20
        $region19: #{tpu_custom_call.1} parent=11 // pred_region
          _
        $region20: #{tpu_custom_call.1} parent=11 // pred_fallthru
          _
        // Predicated region
        $region21: #{tpu_custom_call.1} parent=11 // pred_check
          %p171 = pneg %p103
        $region22: #{tpu_custom_call.1} parent=11 // pred_check_branch
          %173 = sbr.rel (%p171) target = $region24
        $region23: #{tpu_custom_call.1} parent=11 // pred_region
          _
        $region24: #{tpu_custom_call.1} parent=11 // pred_fallthru
          _
        // Predicated region
        $region25: #{tpu_custom_call.1} parent=11 // pred_check
          %p174 = pneg %p124
        $region26: #{tpu_custom_call.1} parent=11 // pred_check_branch
          %176 = sbr.rel (%p174) target = $region28
        $region27: #{tpu_custom_call.1} parent=11 // pred_region
          _
        $region28: #{tpu_custom_call.1} parent=11 // pred_fallthru
          _
      $region12: #{tpu_custom_call.1} parent=5 // pred_fallthru
        _
      %p177 = scmp.lt.s32.totalorder %s14, 2
      // Predicated region
      $region29: #{tpu_custom_call.1} parent=5 // pred_check
        %p178 = pneg %p177
      $region30: #{tpu_custom_call.1} parent=5 // pred_check_branch
        %180 = sbr.rel (%p178) target = $region32
      $region31: #{tpu_custom_call.1} parent=5 // pred_region
        // Predicated region
        $region33: #{tpu_custom_call.1} parent=31 // pred_check
          %p181 = pneg %p34
        $region34: #{tpu_custom_call.1} parent=31 // pred_check_branch
          %183 = sbr.rel (%p181) target = $region36
        $region35: #{tpu_custom_call.1} parent=31 // pred_region
          %s184 = sand.u32 %s24, 1
          %s185 = sand.u32 %s24, 1
          %s186 = smul.addr %s185, 32
          %s187 = scalar_lea.vmem [#allocation3], %s186
          %s188 = smul.u32 2, %s14
          %s189 = smul.addr %s188, 8
          %s190 = scalar_lea.vmem %s0, %s189
          // Predicated region
          $region37: #{tpu_custom_call.1} parent=35 // pred_check
            _
          $region38: #{tpu_custom_call.1} parent=35 // pred_check_branch
            %192 = sbr.rel (0) target = $region40
          $region39: #{tpu_custom_call.1} parent=35 // pred_region
            // Predicated region
            $region41: #{tpu_custom_call.1} parent=39 // pred_check
              _
            $region42: #{tpu_custom_call.1} parent=39 // pred_check_branch
              %194 = sbr.rel (0) target = $region44
            $region43: #{tpu_custom_call.1} parent=39 // pred_region
              loop: start=0, step=1, limit=1
              $region45: #{tpu_custom_call.1} parent=43 // loop_pre_header
                _
              $region46: #{tpu_custom_call.1} parent=43 // loop_header
                %s196 = sphi 0, %s200
                %p197 = scmp.ge.s32.totalorder %s196, 1
                %s201 = sphi %s190, %s190
                %s202 = sphi %s187, %s187
              $region47: #{tpu_custom_call.1} parent=43 // loop_header_branch
                %199 = sbr.rel (%p197) target = $region51
              $region48: #{tpu_custom_call.1} parent=43 // loop_body
                %v203 = vld [vmem:[%s201] sm:$0xff]
                %204 = vst [vmem:[%s202] sm:$0xff] %v203
                %v205 = vld [vmem:[%s201 + $0x8] sm:$0xff]
                %206 = vst [vmem:[%s202 + $0x8] sm:$0xff] %v205
                %v207 = vld [vmem:[%s201 + $0x20] sm:$0xff]
                %208 = vst [vmem:[%s202 + $0x10] sm:$0xff] %v207
                %v209 = vld [vmem:[%s201 + $0x28] sm:$0xff]
                %210 = vst [vmem:[%s202 + $0x18] sm:$0xff] %v209
              $region49: #{tpu_custom_call.1} parent=43 // loop_footer
                %s200 = sadd.s32 1, %s196
              $region50: #{tpu_custom_call.1} parent=43 // loop_footer_branch
                %195 = sbr.rel target = $region46
              $region51: #{tpu_custom_call.1} parent=43 // loop_exit
                _
            $region44: #{tpu_custom_call.1} parent=39 // pred_fallthru
              _
            // Predicated region
            $region52: #{tpu_custom_call.1} parent=39 // pred_check
              _
            $region53: #{tpu_custom_call.1} parent=39 // pred_check_branch
              %212 = sbr.rel target = $region55
            $region54: #{tpu_custom_call.1} parent=39 // pred_region
              _
            $region55: #{tpu_custom_call.1} parent=39 // pred_fallthru
              _
          $region40: #{tpu_custom_call.1} parent=35 // pred_fallthru
            _
          %213 = vnop
        $region36: #{tpu_custom_call.1} parent=31 // pred_fallthru
          _
      $region32: #{tpu_custom_call.1} parent=5 // pred_fallthru
        _
      %p214 = scmp.le.s32.totalorder 1, %s14
      %p215 = scmp.lt.s32.totalorder %s14, 3
      %p216 = pnand %p214, %p215
      %p217 = pneg %p216
      // Predicated region
      $region56: #{tpu_custom_call.1} parent=5 // pred_check
        _
      $region57: #{tpu_custom_call.1} parent=5 // pred_check_branch
        %219 = sbr.rel (%p216) target = $region59
      $region58: #{tpu_custom_call.1} parent=5 // pred_region
        %s220 = ssub.s32 %s14, 1
        %s221 = sand.u32 %s27, 1
        %s222 = sand.u32 %s27, 1
        %s223 = smul.addr %s222, 32
        %s224 = scalar_lea.vmem [#allocation3], %s223
        // Predicated region
        $region60: #{tpu_custom_call.1} parent=58 // pred_check
          %p225 = pneg %p40
        $region61: #{tpu_custom_call.1} parent=58 // pred_check_branch
          %227 = sbr.rel (%p225) target = $region63
        $region62: #{tpu_custom_call.1} parent=58 // pred_region
          _
        $region63: #{tpu_custom_call.1} parent=58 // pred_fallthru
          _
        %s228 = sand.u32 %s27, 1
        %s229 = sand.u32 %s27, 1
        %s230 = smul.addr %s229, 32
        %s231 = scalar_lea.vmem [#allocation3], %s230
        %p232 = pneg %p40
        %p233 = pneg %p37
        %p234 = pneg %p61
        %p235 = pneg %p58
        %p236 = pneg %p82
        %p237 = pneg %p79
        %p238 = pneg %p103
        %p239 = pneg %p100
        %p240 = pneg %p124
        %p241 = pneg %p121
        %p242 = pneg %p150
        %p243 = pneg %p147
        %s244 = sand.u32 %s137, 1
        %s245 = scalar_lea.sflag [#allocation5], %s244
        %s246 = sand.u32 %s137, 1
        %s247 = smul.addr %s246, 2
        %s248 = scalar_lea.vmem [#allocation4], %s247
        %s249 = smul.u32 2, %s19
        %s250 = smul.u32 2, %s19
        %v251 = vld [vmem:[%s224] sm:$0xff]
        %v252 = vld [vmem:[%s224 + $0x8] sm:$0xff]
        %v253 = vld [vmem:[%s224 + $0x10] sm:$0xff]
        %v254 = vld [vmem:[%s224 + $0x18] sm:$0xff]
        %v255 = vsub.f32 %v251, 1.0
        %v256 = vsub.f32 %v252, 1.0
        %v257 = vsub.f32 %v253, 1.0
        %v258 = vsub.f32 %v254, 1.0
        %v259 = vmul.f32 %v255, %v255
        %v260 = vmul.f32 %v256, %v256
        %v261 = vmul.f32 %v257, %v257
        %v262 = vmul.f32 %v258, %v258
        %v263 = vsub.f32 0.0, %v259
        %v264 = vsub.f32 0.0, %v260
        %v265 = vsub.f32 0.0, %v261
        %v266 = vsub.f32 0.0, %v262
        %v267 = vmul.f32 %v263, 50.0
        %v268 = vmul.f32 %v264, 50.0
        %v269 = vmul.f32 %v265, 50.0
        %v270 = vmul.f32 %v266, 50.0
        %v271 = vmul.f32 %v267, 1.442695
        %v272 = vpow.pop %v271
        %v273 = vmul.f32 %v268, 1.442695
        %v274 = vpow.pop %v273
        %v275 = vmul.f32 %v269, 1.442695
        %v276 = vpow.pop %v275
        %v277 = vmul.f32 %v270, 1.442695
        %v278 = vpow.pop %v277
        %279 = vst [vmem:[#allocation2] sm:$0xff] %v272
        %280 = vst [vmem:[#allocation2 + $0x8] sm:$0xff] %v274
        %281 = vst [vmem:[#allocation2 + $0x10] sm:$0xff] %v276
        %282 = vst [vmem:[#allocation2 + $0x18] sm:$0xff] %v278
        %v283 = vsub.f32 %v251, 0.75
        %v284 = vsub.f32 %v252, 0.75
        %v285 = vsub.f32 %v253, 0.75
        %v286 = vsub.f32 %v254, 0.75
        %v287 = vmul.f32 %v283, %v283
        %v288 = vmul.f32 %v284, %v284
        %v289 = vmul.f32 %v285, %v285
        %v290 = vmul.f32 %v286, %v286
        %v291 = vsub.f32 0.0, %v287
        %v292 = vsub.f32 0.0, %v288
        %v293 = vsub.f32 0.0, %v289
        %v294 = vsub.f32 0.0, %v290
        %v295 = vmul.f32 %v291, 50.0
        %v296 = vmul.f32 %v292, 50.0
        %v297 = vmul.f32 %v293, 50.0
        %v298 = vmul.f32 %v294, 50.0
        %v299 = vmul.f32 %v295, 1.442695
        %v300 = vpow.pop %v299
        %v301 = vmul.f32 %v296, 1.442695
        %v302 = vpow.pop %v301
        %v303 = vmul.f32 %v297, 1.442695
        %v304 = vpow.pop %v303
        %v305 = vmul.f32 %v298, 1.442695
        %v306 = vpow.pop %v305
        %307 = vst [vmem:[#allocation2 + $0x20] sm:$0xff] %v300
        %308 = vst [vmem:[#allocation2 + $0x28] sm:$0xff] %v302
        %309 = vst [vmem:[#allocation2 + $0x30] sm:$0xff] %v304
        %310 = vst [vmem:[#allocation2 + $0x38] sm:$0xff] %v306
        %v311 = vsub.f32 %v251, 0.5
        %v312 = vsub.f32 %v252, 0.5
        %v313 = vsub.f32 %v253, 0.5
        %v314 = vsub.f32 %v254, 0.5
        %v315 = vmul.f32 %v311, %v311
        %v316 = vmul.f32 %v312, %v312
        %v317 = vmul.f32 %v313, %v313
        %v318 = vmul.f32 %v314, %v314
        %v319 = vsub.f32 0.0, %v315
        %v320 = vsub.f32 0.0, %v316
        %v321 = vsub.f32 0.0, %v317
        %v322 = vsub.f32 0.0, %v318
        %v323 = vmul.f32 %v319, 50.0
        %v324 = vmul.f32 %v320, 50.0
        %v325 = vmul.f32 %v321, 50.0
        %v326 = vmul.f32 %v322, 50.0
        %v327 = vmul.f32 %v323, 1.442695
        %v328 = vpow.pop %v327
        %v329 = vmul.f32 %v324, 1.442695
        %v330 = vpow.pop %v329
        %v331 = vmul.f32 %v325, 1.442695
        %v332 = vpow.pop %v331
        %v333 = vmul.f32 %v326, 1.442695
        %v334 = vpow.pop %v333
        %335 = vst [vmem:[#allocation2 + $0x40] sm:$0xff] %v328
        %336 = vst [vmem:[#allocation2 + $0x48] sm:$0xff] %v330
        %337 = vst [vmem:[#allocation2 + $0x50] sm:$0xff] %v332
        %338 = vst [vmem:[#allocation2 + $0x58] sm:$0xff] %v334
        %v339 = vsub.f32 %v251, 0.25
        %v340 = vsub.f32 %v252, 0.25
        %v341 = vsub.f32 %v253, 0.25
        %v342 = vsub.f32 %v254, 0.25
        %v343 = vmul.f32 %v339, %v339
        %v344 = vmul.f32 %v340, %v340
        %v345 = vmul.f32 %v341, %v341
        %v346 = vmul.f32 %v342, %v342
        %v347 = vsub.f32 0.0, %v343
        %v348 = vsub.f32 0.0, %v344
        %v349 = vsub.f32 0.0, %v345
        %v350 = vsub.f32 0.0, %v346
        %v351 = vmul.f32 %v347, 50.0
        %v352 = vmul.f32 %v348, 50.0
        %v353 = vmul.f32 %v349, 50.0
        %v354 = vmul.f32 %v350, 50.0
        %v355 = vmul.f32 %v351, 1.442695
        %v356 = vpow.pop %v355
        %v357 = vmul.f32 %v352, 1.442695
        %v358 = vpow.pop %v357
        %v359 = vmul.f32 %v353, 1.442695
        %v360 = vpow.pop %v359
        %v361 = vmul.f32 %v354, 1.442695
        %v362 = vpow.pop %v361
        %363 = vst [vmem:[#allocation2 + $0x60] sm:$0xff] %v356
        %364 = vst [vmem:[#allocation2 + $0x68] sm:$0xff] %v358
        %365 = vst [vmem:[#allocation2 + $0x70] sm:$0xff] %v360
        %366 = vst [vmem:[#allocation2 + $0x78] sm:$0xff] %v362
        %v367 = vmul.f32 %v251, %v251
        %v368 = vmul.f32 %v252, %v252
        %v369 = vmul.f32 %v253, %v253
        %v370 = vmul.f32 %v254, %v254
        %v371 = vsub.f32 0.0, %v367
        %v372 = vsub.f32 0.0, %v368
        %v373 = vsub.f32 0.0, %v369
        %v374 = vsub.f32 0.0, %v370
        %v375 = vmul.f32 %v371, 50.0
        %v376 = vmul.f32 %v372, 50.0
        %v377 = vmul.f32 %v373, 50.0
        %v378 = vmul.f32 %v374, 50.0
        %v379 = vmul.f32 %v375, 1.442695
        %v380 = vpow.pop %v379
        %v381 = vmul.f32 %v376, 1.442695
        %v382 = vpow.pop %v381
        %v383 = vmul.f32 %v377, 1.442695
        %v384 = vpow.pop %v383
        %v385 = vmul.f32 %v378, 1.442695
        %v386 = vpow.pop %v385
        %387 = vst [vmem:[#allocation2 + $0x80] sm:$0xff] %v380
        %388 = vst [vmem:[#allocation2 + $0x88] sm:$0xff] %v382
        %389 = vst [vmem:[#allocation2 + $0x90] sm:$0xff] %v384
        %390 = vst [vmem:[#allocation2 + $0x98] sm:$0xff] %v386
        %v391 = vsub.f32 %v251, -0.25
        %v392 = vsub.f32 %v252, -0.25
        %v393 = vsub.f32 %v253, -0.25
        %v394 = vsub.f32 %v254, -0.25
        %v395 = vmul.f32 %v391, %v391
        %v396 = vmul.f32 %v392, %v392
        %v397 = vmul.f32 %v393, %v393
        %v398 = vmul.f32 %v394, %v394
        %v399 = vsub.f32 0.0, %v395
        %v400 = vsub.f32 0.0, %v396
        %v401 = vsub.f32 0.0, %v397
        %v402 = vsub.f32 0.0, %v398
        %v403 = vmul.f32 %v399, 50.0
        %v404 = vmul.f32 %v400, 50.0
        %v405 = vmul.f32 %v401, 50.0
        %v406 = vmul.f32 %v402, 50.0
        %v407 = vmul.f32 %v403, 1.442695
        %v408 = vpow.pop %v407
        %v409 = vmul.f32 %v404, 1.442695
        %v410 = vpow.pop %v409
        %v411 = vmul.f32 %v405, 1.442695
        %v412 = vpow.pop %v411
        %v413 = vmul.f32 %v406, 1.442695
        %v414 = vpow.pop %v413
        %415 = vst [vmem:[#allocation2 + $0xa0] sm:$0xff] %v408
        %416 = vst [vmem:[#allocation2 + $0xa8] sm:$0xff] %v410
        %417 = vst [vmem:[#allocation2 + $0xb0] sm:$0xff] %v412
        %418 = vst [vmem:[#allocation2 + $0xb8] sm:$0xff] %v414
        %v419 = vsub.f32 %v251, -0.5
        %v420 = vsub.f32 %v252, -0.5
        %v421 = vsub.f32 %v253, -0.5
        %v422 = vsub.f32 %v254, -0.5
        %v423 = vmul.f32 %v419, %v419
        %v424 = vmul.f32 %v420, %v420
        %v425 = vmul.f32 %v421, %v421
        %v426 = vmul.f32 %v422, %v422
        %v427 = vsub.f32 0.0, %v423
        %v428 = vsub.f32 0.0, %v424
        %v429 = vsub.f32 0.0, %v425
        %v430 = vsub.f32 0.0, %v426
        %v431 = vmul.f32 %v427, 50.0
        %v432 = vmul.f32 %v428, 50.0
        %v433 = vmul.f32 %v429, 50.0
        %v434 = vmul.f32 %v430, 50.0
        %v435 = vmul.f32 %v431, 1.442695
        %v436 = vpow.pop %v435
        %v437 = vmul.f32 %v432, 1.442695
        %v438 = vpow.pop %v437
        %v439 = vmul.f32 %v433, 1.442695
        %v440 = vpow.pop %v439
        %v441 = vmul.f32 %v434, 1.442695
        %v442 = vpow.pop %v441
        %443 = vst [vmem:[#allocation2 + $0xc0] sm:$0xff] %v436
        %444 = vst [vmem:[#allocation2 + $0xc8] sm:$0xff] %v438
        %445 = vst [vmem:[#allocation2 + $0xd0] sm:$0xff] %v440
        %446 = vst [vmem:[#allocation2 + $0xd8] sm:$0xff] %v442
        %v447 = vsub.f32 %v251, -0.75
        %v448 = vsub.f32 %v252, -0.75
        %v449 = vsub.f32 %v253, -0.75
        %v450 = vsub.f32 %v254, -0.75
        %v451 = vmul.f32 %v447, %v447
        %v452 = vmul.f32 %v448, %v448
        %v453 = vmul.f32 %v449, %v449
        %v454 = vmul.f32 %v450, %v450
        %v455 = vsub.f32 0.0, %v451
        %v456 = vsub.f32 0.0, %v452
        %v457 = vsub.f32 0.0, %v453
        %v458 = vsub.f32 0.0, %v454
        %v459 = vmul.f32 %v455, 50.0
        %v460 = vmul.f32 %v456, 50.0
        %v461 = vmul.f32 %v457, 50.0
        %v462 = vmul.f32 %v458, 50.0
        %v463 = vmul.f32 %v459, 1.442695
        %v464 = vpow.pop %v463
        %v465 = vmul.f32 %v460, 1.442695
        %v466 = vpow.pop %v465
        %v467 = vmul.f32 %v461, 1.442695
        %v468 = vpow.pop %v467
        %v469 = vmul.f32 %v462, 1.442695
        %v470 = vpow.pop %v469
        %471 = vst [vmem:[#allocation2 + $0xe0] sm:$0xff] %v464
        %472 = vst [vmem:[#allocation2 + $0xe8] sm:$0xff] %v466
        %473 = vst [vmem:[#allocation2 + $0xf0] sm:$0xff] %v468
        %474 = vst [vmem:[#allocation2 + $0xf8] sm:$0xff] %v470
        %v475 = vld [vmem:[%s1] sm:$0xff]
        %v476 = vld [vmem:[%s1 + $0x8] sm:$0xff]
        %v477 = vld [vmem:[%s1 + $0x10] sm:$0xff]
        %v478 = vld [vmem:[%s1 + $0x18] sm:$0xff]
        %v479 = vld [vmem:[%s1 + $0x20] sm:$0xff]
        %v480 = vld [vmem:[%s1 + $0x28] sm:$0xff]
        %v481 = vld [vmem:[%s1 + $0x30] sm:$0xff]
        %v482 = vld [vmem:[#allocation2] sm:$0xff]
        %v483 = vld [vmem:[#allocation2 + $0x8] sm:$0xff]
        %v484 = vld [vmem:[#allocation2 + $0x10] sm:$0xff]
        %v485 = vld [vmem:[#allocation2 + $0x18] sm:$0xff]
        %v486 = vld [vmem:[#allocation2 + $0x20] sm:$0xff]
        %v487 = vld [vmem:[#allocation2 + $0x28] sm:$0xff]
        %v488 = vld [vmem:[#allocation2 + $0x30] sm:$0xff]
        %v489 = vld [vmem:[#allocation2 + $0x38] sm:$0xff]
        %v490 = vld [vmem:[#allocation2 + $0x40] sm:$0xff]
        %v491 = vld [vmem:[#allocation2 + $0x48] sm:$0xff]
        %v492 = vld [vmem:[#allocation2 + $0x50] sm:$0xff]
        %v493 = vld [vmem:[#allocation2 + $0x58] sm:$0xff]
        %v494 = vld [vmem:[#allocation2 + $0x60] sm:$0xff]
        %v495 = vld [vmem:[#allocation2 + $0x68] sm:$0xff]
        %v496 = vld [vmem:[#allocation2 + $0x70] sm:$0xff]
        %v497 = vld [vmem:[#allocation2 + $0x78] sm:$0xff]
        %v498 = vld [vmem:[#allocation2 + $0x80] sm:$0xff]
        %v499 = vld [vmem:[#allocation2 + $0x88] sm:$0xff]
        %v500 = vld [vmem:[#allocation2 + $0x90] sm:$0xff]
        %v501 = vld [vmem:[#allocation2 + $0x98] sm:$0xff]
        %v502 = vld [vmem:[#allocation2 + $0xa0] sm:$0xff]
        %v503 = vld [vmem:[#allocation2 + $0xa8] sm:$0xff]
        %v504 = vld [vmem:[#allocation2 + $0xb0] sm:$0xff]
        %v505 = vld [vmem:[#allocation2 + $0xb8] sm:$0xff]
        %v506 = vld [vmem:[#allocation2 + $0xc0] sm:$0xff]
        %v507 = vld [vmem:[#allocation2 + $0xc8] sm:$0xff]
        %v508 = vld [vmem:[#allocation2 + $0xd0] sm:$0xff]
        %v509 = vld [vmem:[#allocation2 + $0xd8] sm:$0xff]
        %v510 = vld [vmem:[#allocation2 + $0xe0] sm:$0xff]
        %v511 = vld [vmem:[#allocation2 + $0xe8] sm:$0xff]
        %v512 = vld [vmem:[#allocation2 + $0xf0] sm:$0xff]
        %v513 = vld [vmem:[#allocation2 + $0xf8] sm:$0xff]
        %514 = vmatprep.subr.mxu0 %v513
        %515 = vmatpush1.msra.mxu0 %v512
        %516 = vmatprep.subr.mxu0 %v511
        %517 = vmatpush1.msra.mxu0 %v510
        %518 = vmatprep.subr.mxu0 %v509
        %519 = vmatpush1.msra.mxu0 %v508
        %520 = vmatprep.subr.mxu0 %v507
        %521 = vmatpush1.msra.mxu0 %v506
        %522 = vmatprep.subr.mxu0 %v505
        %523 = vmatpush1.msra.mxu0 %v504
        %524 = vmatprep.subr.mxu0 %v503
        %525 = vmatpush1.msra.mxu0 %v502
        %526 = vmatprep.subr.mxu0 %v501
        %527 = vmatpush1.msra.mxu0 %v500
        %528 = vmatprep.subr.mxu0 %v499
        %529 = vmatpush1.msra.mxu0 %v498
        %530 = vmatprep.subr.mxu0 %v497
        %531 = vmatpush1.msra.mxu0 %v496
        %532 = vmatprep.subr.mxu0 %v495
        %533 = vmatpush1.msra.mxu0 %v494
        %534 = vmatprep.subr.mxu0 %v493
        %535 = vmatpush1.msra.mxu0 %v492
        %536 = vmatprep.subr.mxu0 %v491
        %537 = vmatpush1.msra.mxu0 %v490
        %538 = vmatprep.subr.mxu0 %v489
        %539 = vmatpush1.msra.mxu0 %v488
        %540 = vmatprep.subr.mxu0 %v487
        %541 = vmatpush1.msra.mxu0 %v486
        %542 = vmatprep.subr.mxu0 %v485
        %543 = vmatpush1.msra.mxu0 %v484
        %544 = vmatprep.subr.mxu0 %v483
        %545 = vmatpush1.msra.mxu0 %v482
        %546 = vmatprep.subr.mxu0 0.0
        %547 = vmatpush2.msra.mxu0 0.0
        %548 = vmatprep.subr.mxu0 0.0
        %549 = vmatpush2.msra.mxu0 0.0
        %550 = vmatprep.subr.mxu0 0.0
        %551 = vmatpush2.msra.mxu0 0.0
        %552 = vmatprep.subr.mxu0 0.0
        %553 = vmatpush2.msra.mxu0 0.0
        %554 = vmatprep.subr.mxu0 0.0
        %555 = vmatpush2.msra.mxu0 0.0
        %556 = vmatprep.subr.mxu0 0.0
        %557 = vmatpush2.msra.mxu0 0.0
        %558 = vmatprep.subr.mxu0 0.0
        %559 = vmatpush2.msra.mxu0 0.0
        %560 = vmatprep.subr.mxu0 0.0
        %561 = vmatpush2.msra.mxu0 0.0
        %562 = vmatprep.subr.mxu0 0.0
        %563 = vmatpush2.msra.mxu0 0.0
        %564 = vmatprep.subr.mxu0 0.0
        %565 = vmatpush2.msra.mxu0 0.0
        %566 = vmatprep.subr.mxu0 0.0
        %567 = vmatpush2.msra.mxu0 0.0
        %568 = vmatprep.subr.mxu0 0.0
        %569 = vmatpush2.msra.mxu0 0.0
        %570 = vmatprep.subr.mxu0 0.0
        %571 = vmatpush2.msra.mxu0 0.0
        %572 = vmatprep.subr.mxu0 0.0
        %573 = vmatpush2.msra.mxu0 0.0
        %574 = vmatprep.subr.mxu0 0.0
        %575 = vmatpush2.msra.mxu0 0.0
        %576 = vmatprep.subr.mxu0 0.0
        %577 = vmatpush2.msra.mxu0 0.0
        %578 = vmatprep.mubr.f32.mxu0 0.0
        %579 = vmatmul.mubr.f32.gmra.mxu0 %v475
        %v580 = vpop.f32.mrf.mxu0
        %v581 = vadd.f32 1e-06, %v580
        %v582 = vpop.f32.mrf.mxu0
        %v583 = vadd.f32 1e-06, %v582
        %584 = vmatprep.mubr.f32.mxu0 0.0
        %585 = vmatmul.mubr.f32.gmra.mxu0 %v476
        %v586 = vpop.f32.mrf.mxu0
        %v587 = vadd.f32 1e-06, %v586
        %v588 = vpop.f32.mrf.mxu0
        %v589 = vadd.f32 1e-06, %v588
        %590 = vmatprep.mubr.f32.mxu0 0.0
        %591 = vmatmul.mubr.f32.gmra.mxu0 %v477
        %v592 = vpop.f32.mrf.mxu0
        %v593 = vadd.f32 1e-06, %v592
        %v594 = vpop.f32.mrf.mxu0
        %v595 = vadd.f32 1e-06, %v594
        %596 = vmatprep.mubr.f32.mxu0 0.0
        %597 = vmatmul.mubr.f32.gmra.mxu0 %v478
        %v598 = vpop.f32.mrf.mxu0
        %v599 = vadd.f32 1e-06, %v598
        %v600 = vpop.f32.mrf.mxu0
        %v601 = vadd.f32 1e-06, %v600
        %602 = vmatprep.mubr.f32.mxu0 0.0
        %603 = vmatmul.mubr.f32.gmra.mxu0 %v479
        %v604 = vpop.f32.mrf.mxu0
        %v605 = vadd.f32 1e-06, %v604
        %v606 = vpop.f32.mrf.mxu0
        %v607 = vadd.f32 1e-06, %v606
        %608 = vmatprep.mubr.f32.mxu0 0.0
        %609 = vmatmul.mubr.f32.gmra.mxu0 %v480
        %v610 = vpop.f32.mrf.mxu0
        %v611 = vadd.f32 1e-06, %v610
        %v612 = vpop.f32.mrf.mxu0
        %v613 = vadd.f32 1e-06, %v612
        %614 = vmatprep.mubr.f32.mxu0 0.0
        %615 = vmatmul.mubr.f32.gmra.mxu0 %v481
        %v616 = vpop.f32.mrf.mxu0
        %v617 = vadd.f32 1e-06, %v616
        %v618 = vpop.f32.mrf.mxu0
        %v619 = vadd.f32 1e-06, %v618
        %620 = vdwg.mxu0
        %v621 = vlog2.pop %v581
        %v622 = vmul.f32 %v621, 0.6931472
        %v623 = vlog2.pop %v583
        %v624 = vmul.f32 %v623, 0.6931472
        %v625 = vlog2.pop %v587
        %v626 = vmul.f32 %v625, 0.6931472
        %v627 = vlog2.pop %v589
        %v628 = vmul.f32 %v627, 0.6931472
        %v629 = vlog2.pop %v593
        %v630 = vmul.f32 %v629, 0.6931472
        %v631 = vlog2.pop %v595
        %v632 = vmul.f32 %v631, 0.6931472
        %v633 = vlog2.pop %v599
        %v634 = vmul.f32 %v633, 0.6931472
        %v635 = vlog2.pop %v601
        %v636 = vmul.f32 %v635, 0.6931472
        %v637 = vlog2.pop %v605
        %v638 = vmul.f32 %v637, 0.6931472
        %v639 = vlog2.pop %v607
        %v640 = vmul.f32 %v639, 0.6931472
        %v641 = vlog2.pop %v611
        %v642 = vmul.f32 %v641, 0.6931472
        %v643 = vlog2.pop %v613
        %v644 = vmul.f32 %v643, 0.6931472
        %v645 = vlog2.pop %v617
        %v646 = vmul.f32 %v645, 0.6931472
        %v647 = vlog2.pop %v619
        %v648 = vmul.f32 %v647, 0.6931472
        %v649 = vld [vmem:[%s2] sm:$0xff]
        %v650 = vld [vmem:[%s2 + $0x8] sm:$0xff]
        %v651 = vld [vmem:[%s2 + $0x10] sm:$0xff]
        %v652 = vld [vmem:[%s2 + $0x18] sm:$0xff]
        %v653 = vld [vmem:[%s2 + $0x20] sm:$0xff]
        %v654 = vld [vmem:[%s2 + $0x28] sm:$0xff]
        %v655 = vld [vmem:[%s2 + $0x30] sm:$0xff]
        %v656 = vld [vmem:[%s2 + $0x38] sm:$0xff]
        %v657 = vld [vmem:[%s2 + $0x40] sm:$0xff]
        %v658 = vld [vmem:[%s2 + $0x48] sm:$0xff]
        %v659 = vld [vmem:[%s2 + $0x50] sm:$0xff]
        %v660 = vld [vmem:[%s2 + $0x58] sm:$0xff]
        %v661 = vld [vmem:[%s2 + $0x60] sm:$0xff]
        %v662 = vld [vmem:[%s2 + $0x68] sm:$0xff]
        %v663 = vld [vmem:[%s2 + $0x70] sm:$0xff]
        %v664 = vld [vmem:[%s2 + $0x78] sm:$0xff]
        %v665 = vld [vmem:[%s2 + $0x80] sm:$0xff]
        %v666 = vld [vmem:[%s2 + $0x88] sm:$0xff]
        %v667 = vld [vmem:[%s2 + $0x90] sm:$0xff]
        %v668 = vld [vmem:[%s2 + $0x98] sm:$0xff]
        %v669 = vld [vmem:[%s2 + $0xa0] sm:$0xff]
        %v670 = vld [vmem:[%s2 + $0xa8] sm:$0xff]
        %v671 = vld [vmem:[%s2 + $0xb0] sm:$0xff]
        %v672 = vld [vmem:[%s2 + $0xb8] sm:$0xff]
        %v673 = vld [vmem:[%s2 + $0xc0] sm:$0xff]
        %v674 = vld [vmem:[%s2 + $0xc8] sm:$0xff]
        %v675 = vld [vmem:[%s2 + $0xd0] sm:$0xff]
        %v676 = vld [vmem:[%s2 + $0xd8] sm:$0xff]
        %v677 = vld [vmem:[%s3] sm:$0xff]
        %v678 = vld [vmem:[%s3 + $0x8] sm:$0xff]
        %v679 = vld [vmem:[%s3 + $0x10] sm:$0xff]
        %v680 = vld [vmem:[%s3 + $0x18] sm:$0xff]
        %v681 = vld [vmem:[%s3 + $0x20] sm:$0xff]
        %v682 = vld [vmem:[%s3 + $0x28] sm:$0xff]
        %v683 = vld [vmem:[%s3 + $0x30] sm:$0xff]
        %v684 = vld [vmem:[%s3 + $0x38] sm:$0xff]
        %v685 = vld [vmem:[%s3 + $0x40] sm:$0xff]
        %v686 = vld [vmem:[%s3 + $0x48] sm:$0xff]
        %v687 = vld [vmem:[%s3 + $0x50] sm:$0xff]
        %v688 = vld [vmem:[%s3 + $0x58] sm:$0xff]
        %v689 = vld [vmem:[%s3 + $0x60] sm:$0xff]
        %v690 = vld [vmem:[%s3 + $0x68] sm:$0xff]
        %v691 = vld [vmem:[%s3 + $0x70] sm:$0xff]
        %v692 = vld [vmem:[%s3 + $0x78] sm:$0xff]
        %v693 = vld [vmem:[%s3 + $0x80] sm:$0xff]
        %v694 = vld [vmem:[%s3 + $0x88] sm:$0xff]
        %v695 = vld [vmem:[%s3 + $0x90] sm:$0xff]
        %v696 = vld [vmem:[%s3 + $0x98] sm:$0xff]
        %v697 = vld [vmem:[%s3 + $0xa0] sm:$0xff]
        %v698 = vld [vmem:[%s3 + $0xa8] sm:$0xff]
        %v699 = vld [vmem:[%s3 + $0xb0] sm:$0xff]
        %v700 = vld [vmem:[%s3 + $0xb8] sm:$0xff]
        %v701 = vld [vmem:[%s3 + $0xc0] sm:$0xff]
        %v702 = vld [vmem:[%s3 + $0xc8] sm:$0xff]
        %v703 = vld [vmem:[%s3 + $0xd0] sm:$0xff]
        %v704 = vld [vmem:[%s3 + $0xd8] sm:$0xff]
        %706 = vset.pattern.permute.xlu0 0
        %707 = vperm.xlu0 %706, %v677
        %v708 = vpop.permute.xlu0 %707
        %711 = vset.pattern.permute.xlu0 0
        %712 = vperm.xlu0 %711, %v678
        %v713 = vpop.permute.xlu0 %712
        %716 = vset.pattern.permute.xlu0 0
        %717 = vperm.xlu0 %716, %v679
        %v718 = vpop.permute.xlu0 %717
        %721 = vset.pattern.permute.xlu0 0
        %722 = vperm.xlu0 %721, %v680
        %v723 = vpop.permute.xlu0 %722
        %726 = vset.pattern.permute.xlu0 0
        %727 = vperm.xlu0 %726, %v681
        %v728 = vpop.permute.xlu0 %727
        %731 = vset.pattern.permute.xlu0 0
        %732 = vperm.xlu0 %731, %v682
        %v733 = vpop.permute.xlu0 %732
        %736 = vset.pattern.permute.xlu0 0
        %737 = vperm.xlu0 %736, %v683
        %v738 = vpop.permute.xlu0 %737
        %741 = vset.pattern.permute.xlu0 0
        %742 = vperm.xlu0 %741, %v684
        %v743 = vpop.permute.xlu0 %742
        %746 = vset.pattern.permute.xlu0 0
        %747 = vperm.xlu0 %746, %v685
        %v748 = vpop.permute.xlu0 %747
        %751 = vset.pattern.permute.xlu0 0
        %752 = vperm.xlu0 %751, %v686
        %v753 = vpop.permute.xlu0 %752
        %756 = vset.pattern.permute.xlu0 0
        %757 = vperm.xlu0 %756, %v687
        %v758 = vpop.permute.xlu0 %757
        %761 = vset.pattern.permute.xlu0 0
        %762 = vperm.xlu0 %761, %v688
        %v763 = vpop.permute.xlu0 %762
        %766 = vset.pattern.permute.xlu0 0
        %767 = vperm.xlu0 %766, %v689
        %v768 = vpop.permute.xlu0 %767
        %771 = vset.pattern.permute.xlu0 0
        %772 = vperm.xlu0 %771, %v690
        %v773 = vpop.permute.xlu0 %772
        %776 = vset.pattern.permute.xlu0 0
        %777 = vperm.xlu0 %776, %v691
        %v778 = vpop.permute.xlu0 %777
        %781 = vset.pattern.permute.xlu0 0
        %782 = vperm.xlu0 %781, %v692
        %v783 = vpop.permute.xlu0 %782
        %786 = vset.pattern.permute.xlu0 0
        %787 = vperm.xlu0 %786, %v693
        %v788 = vpop.permute.xlu0 %787
        %791 = vset.pattern.permute.xlu0 0
        %792 = vperm.xlu0 %791, %v694
        %v793 = vpop.permute.xlu0 %792
        %796 = vset.pattern.permute.xlu0 0
        %797 = vperm.xlu0 %796, %v695
        %v798 = vpop.permute.xlu0 %797
        %801 = vset.pattern.permute.xlu0 0
        %802 = vperm.xlu0 %801, %v696
        %v803 = vpop.permute.xlu0 %802
        %806 = vset.pattern.permute.xlu0 0
        %807 = vperm.xlu0 %806, %v697
        %v808 = vpop.permute.xlu0 %807
        %811 = vset.pattern.permute.xlu0 0
        %812 = vperm.xlu0 %811, %v698
        %v813 = vpop.permute.xlu0 %812
        %816 = vset.pattern.permute.xlu0 0
        %817 = vperm.xlu0 %816, %v699
        %v818 = vpop.permute.xlu0 %817
        %821 = vset.pattern.permute.xlu0 0
        %822 = vperm.xlu0 %821, %v700
        %v823 = vpop.permute.xlu0 %822
        %826 = vset.pattern.permute.xlu0 0
        %827 = vperm.xlu0 %826, %v701
        %v828 = vpop.permute.xlu0 %827
        %831 = vset.pattern.permute.xlu0 0
        %832 = vperm.xlu0 %831, %v702
        %v833 = vpop.permute.xlu0 %832
        %836 = vset.pattern.permute.xlu0 0
        %837 = vperm.xlu0 %836, %v703
        %v838 = vpop.permute.xlu0 %837
        %841 = vset.pattern.permute.xlu0 0
        %842 = vperm.xlu0 %841, %v704
        %v843 = vpop.permute.xlu0 %842
        %vm845 = vcmask 457728
        %v847 = vsel %vm845, %v649, 0
        %v850 = vsel %vm845, %v650, 0
        %v853 = vsel %vm845, %v651, 0
        %v856 = vsel %vm845, %v652, 0
        %v859 = vsel %vm845, %v653, 0
        %v862 = vsel %vm845, %v654, 0
        %v865 = vsel %vm845, %v655, 0
        %v868 = vsel %vm845, %v656, 0
        %v871 = vsel %vm845, %v657, 0
        %v874 = vsel %vm845, %v658, 0
        %v877 = vsel %vm845, %v659, 0
        %v880 = vsel %vm845, %v660, 0
        %v883 = vsel %vm845, %v661, 0
        %v886 = vsel %vm845, %v662, 0
        %v889 = vsel %vm845, %v663, 0
        %v892 = vsel %vm845, %v664, 0
        %v895 = vsel %vm845, %v665, 0
        %v898 = vsel %vm845, %v666, 0
        %v901 = vsel %vm845, %v667, 0
        %v904 = vsel %vm845, %v668, 0
        %v907 = vsel %vm845, %v669, 0
        %v910 = vsel %vm845, %v670, 0
        %v913 = vsel %vm845, %v671, 0
        %v916 = vsel %vm845, %v672, 0
        %v919 = vsel %vm845, %v673, 0
        %v922 = vsel %vm845, %v674, 0
        %v925 = vsel %vm845, %v675, 0
        %v928 = vsel %vm845, %v676, 0
        %930 = vmatprep.subr.mxu0 0.0
        %931 = vmatpush1.msra.mxu0 0.0
        %932 = vmatprep.subr.mxu0 0.0
        %933 = vmatpush1.msra.mxu0 0.0
        %934 = vmatprep.subr.mxu0 0.0
        %935 = vmatpush1.msra.mxu0 0.0
        %936 = vmatprep.subr.mxu0 0.0
        %937 = vmatpush1.msra.mxu0 0.0
        %938 = vmatprep.subr.mxu0 0.0
        %939 = vmatpush1.msra.mxu0 0.0
        %940 = vmatprep.subr.mxu0 0.0
        %941 = vmatpush1.msra.mxu0 0.0
        %942 = vmatprep.subr.mxu0 0.0
        %943 = vmatpush1.msra.mxu0 0.0
        %944 = vmatprep.subr.mxu0 0.0
        %945 = vmatpush1.msra.mxu0 0.0
        %946 = vmatprep.subr.mxu0 0.0
        %947 = vmatpush1.msra.mxu0 0.0
        %948 = vmatprep.subr.mxu0 %v648
        %949 = vmatpush1.msra.mxu0 %v646
        %950 = vmatprep.subr.mxu0 %v644
        %951 = vmatpush1.msra.mxu0 %v642
        %952 = vmatprep.subr.mxu0 %v640
        %953 = vmatpush1.msra.mxu0 %v638
        %954 = vmatprep.subr.mxu0 %v636
        %955 = vmatpush1.msra.mxu0 %v634
        %956 = vmatprep.subr.mxu0 %v632
        %957 = vmatpush1.msra.mxu0 %v630
        %958 = vmatprep.subr.mxu0 %v628
        %959 = vmatpush1.msra.mxu0 %v626
        %960 = vmatprep.subr.mxu0 %v624
        %961 = vmatpush1.msra.mxu0 %v622
        %962 = vmatprep.subr.mxu0 0.0
        %963 = vmatpush2.msra.mxu0 0.0
        %964 = vmatprep.subr.mxu0 0.0
        %965 = vmatpush2.msra.mxu0 0.0
        %966 = vmatprep.subr.mxu0 0.0
        %967 = vmatpush2.msra.mxu0 0.0
        %968 = vmatprep.subr.mxu0 0.0
        %969 = vmatpush2.msra.mxu0 0.0
        %970 = vmatprep.subr.mxu0 0.0
        %971 = vmatpush2.msra.mxu0 0.0
        %972 = vmatprep.subr.mxu0 0.0
        %973 = vmatpush2.msra.mxu0 0.0
        %974 = vmatprep.subr.mxu0 0.0
        %975 = vmatpush2.msra.mxu0 0.0
        %976 = vmatprep.subr.mxu0 0.0
        %977 = vmatpush2.msra.mxu0 0.0
        %978 = vmatprep.subr.mxu0 0.0
        %979 = vmatpush2.msra.mxu0 0.0
        %980 = vmatprep.subr.mxu0 0.0
        %981 = vmatpush2.msra.mxu0 0.0
        %982 = vmatprep.subr.mxu0 0.0
        %983 = vmatpush2.msra.mxu0 0.0
        %984 = vmatprep.subr.mxu0 0.0
        %985 = vmatpush2.msra.mxu0 0.0
        %986 = vmatprep.subr.mxu0 0.0
        %987 = vmatpush2.msra.mxu0 0.0
        %988 = vmatprep.subr.mxu0 0.0
        %989 = vmatpush2.msra.mxu0 0.0
        %990 = vmatprep.subr.mxu0 0.0
        %991 = vmatpush2.msra.mxu0 0.0
        %992 = vmatprep.subr.mxu0 0.0
        %993 = vmatpush2.msra.mxu0 0.0
        %994 = vmatprep.mubr.f32.mxu0 0.0
        %995 = vmatmul.mubr.f32.gmra.mxu0 %v847
        %v996 = vpop.f32.mrf.mxu0
        %v997 = vadd.f32 %v708, %v996
        %v998 = vpop.f32.mrf.mxu0
        %v999 = vadd.f32 %v708, %v998
        %1000 = vmatprep.mubr.f32.mxu0 0.0
        %1001 = vmatmul.mubr.f32.gmra.mxu0 %v850
        %v1002 = vpop.f32.mrf.mxu0
        %v1003 = vadd.f32 %v713, %v1002
        %v1004 = vpop.f32.mrf.mxu0
        %v1005 = vadd.f32 %v713, %v1004
        %1006 = vmatprep.mubr.f32.mxu0 0.0
        %1007 = vmatmul.mubr.f32.gmra.mxu0 %v853
        %v1008 = vpop.f32.mrf.mxu0
        %v1009 = vadd.f32 %v718, %v1008
        %v1010 = vpop.f32.mrf.mxu0
        %v1011 = vadd.f32 %v718, %v1010
        %1012 = vmatprep.mubr.f32.mxu0 0.0
        %1013 = vmatmul.mubr.f32.gmra.mxu0 %v856
        %v1014 = vpop.f32.mrf.mxu0
        %v1015 = vadd.f32 %v723, %v1014
        %v1016 = vpop.f32.mrf.mxu0
        %v1017 = vadd.f32 %v723, %v1016
        %1018 = vmatprep.mubr.f32.mxu0 0.0
        %1019 = vmatmul.mubr.f32.gmra.mxu0 %v859
        %v1020 = vpop.f32.mrf.mxu0
        %v1021 = vadd.f32 %v728, %v1020
        %v1022 = vpop.f32.mrf.mxu0
        %v1023 = vadd.f32 %v728, %v1022
        %1024 = vmatprep.mubr.f32.mxu0 0.0
        %1025 = vmatmul.mubr.f32.gmra.mxu0 %v862
        %v1026 = vpop.f32.mrf.mxu0
        %v1027 = vadd.f32 %v733, %v1026
        %v1028 = vpop.f32.mrf.mxu0
        %v1029 = vadd.f32 %v733, %v1028
        %1030 = vmatprep.mubr.f32.mxu0 0.0
        %1031 = vmatmul.mubr.f32.gmra.mxu0 %v865
        %v1032 = vpop.f32.mrf.mxu0
        %v1033 = vadd.f32 %v738, %v1032
        %v1034 = vpop.f32.mrf.mxu0
        %v1035 = vadd.f32 %v738, %v1034
        %1036 = vmatprep.mubr.f32.mxu0 0.0
        %1037 = vmatmul.mubr.f32.gmra.mxu0 %v868
        %v1038 = vpop.f32.mrf.mxu0
        %v1039 = vadd.f32 %v743, %v1038
        %v1040 = vpop.f32.mrf.mxu0
        %v1041 = vadd.f32 %v743, %v1040
        %1042 = vmatprep.mubr.f32.mxu0 0.0
        %1043 = vmatmul.mubr.f32.gmra.mxu0 %v871
        %v1044 = vpop.f32.mrf.mxu0
        %v1045 = vadd.f32 %v748, %v1044
        %v1046 = vpop.f32.mrf.mxu0
        %v1047 = vadd.f32 %v748, %v1046
        %1048 = vmatprep.mubr.f32.mxu0 0.0
        %1049 = vmatmul.mubr.f32.gmra.mxu0 %v874
        %v1050 = vpop.f32.mrf.mxu0
        %v1051 = vadd.f32 %v753, %v1050
        %v1052 = vpop.f32.mrf.mxu0
        %v1053 = vadd.f32 %v753, %v1052
        %1054 = vmatprep.mubr.f32.mxu0 0.0
        %1055 = vmatmul.mubr.f32.gmra.mxu0 %v877
        %v1056 = vpop.f32.mrf.mxu0
        %v1057 = vadd.f32 %v758, %v1056
        %v1058 = vpop.f32.mrf.mxu0
        %v1059 = vadd.f32 %v758, %v1058
        %1060 = vmatprep.mubr.f32.mxu0 0.0
        %1061 = vmatmul.mubr.f32.gmra.mxu0 %v880
        %v1062 = vpop.f32.mrf.mxu0
        %v1063 = vadd.f32 %v763, %v1062
        %v1064 = vpop.f32.mrf.mxu0
        %v1065 = vadd.f32 %v763, %v1064
        %1066 = vmatprep.mubr.f32.mxu0 0.0
        %1067 = vmatmul.mubr.f32.gmra.mxu0 %v883
        %v1068 = vpop.f32.mrf.mxu0
        %v1069 = vadd.f32 %v768, %v1068
        %v1070 = vpop.f32.mrf.mxu0
        %v1071 = vadd.f32 %v768, %v1070
        %1072 = vmatprep.mubr.f32.mxu0 0.0
        %1073 = vmatmul.mubr.f32.gmra.mxu0 %v886
        %v1074 = vpop.f32.mrf.mxu0
        %v1075 = vadd.f32 %v773, %v1074
        %v1076 = vpop.f32.mrf.mxu0
        %v1077 = vadd.f32 %v773, %v1076
        %1078 = vmatprep.mubr.f32.mxu0 0.0
        %1079 = vmatmul.mubr.f32.gmra.mxu0 %v889
        %v1080 = vpop.f32.mrf.mxu0
        %v1081 = vadd.f32 %v778, %v1080
        %v1082 = vpop.f32.mrf.mxu0
        %v1083 = vadd.f32 %v778, %v1082
        %1084 = vmatprep.mubr.f32.mxu0 0.0
        %1085 = vmatmul.mubr.f32.gmra.mxu0 %v892
        %v1086 = vpop.f32.mrf.mxu0
        %v1087 = vadd.f32 %v783, %v1086
        %v1088 = vpop.f32.mrf.mxu0
        %v1089 = vadd.f32 %v783, %v1088
        %1090 = vmatprep.mubr.f32.mxu0 0.0
        %1091 = vmatmul.mubr.f32.gmra.mxu0 %v895
        %v1092 = vpop.f32.mrf.mxu0
        %v1093 = vadd.f32 %v788, %v1092
        %v1094 = vpop.f32.mrf.mxu0
        %v1095 = vadd.f32 %v788, %v1094
        %1096 = vmatprep.mubr.f32.mxu0 0.0
        %1097 = vmatmul.mubr.f32.gmra.mxu0 %v898
        %v1098 = vpop.f32.mrf.mxu0
        %v1099 = vadd.f32 %v793, %v1098
        %v1100 = vpop.f32.mrf.mxu0
        %v1101 = vadd.f32 %v793, %v1100
        %1102 = vmatprep.mubr.f32.mxu0 0.0
        %1103 = vmatmul.mubr.f32.gmra.mxu0 %v901
        %v1104 = vpop.f32.mrf.mxu0
        %v1105 = vadd.f32 %v798, %v1104
        %v1106 = vpop.f32.mrf.mxu0
        %v1107 = vadd.f32 %v798, %v1106
        %1108 = vmatprep.mubr.f32.mxu0 0.0
        %1109 = vmatmul.mubr.f32.gmra.mxu0 %v904
        %v1110 = vpop.f32.mrf.mxu0
        %v1111 = vadd.f32 %v803, %v1110
        %v1112 = vpop.f32.mrf.mxu0
        %v1113 = vadd.f32 %v803, %v1112
        %1114 = vmatprep.mubr.f32.mxu0 0.0
        %1115 = vmatmul.mubr.f32.gmra.mxu0 %v907
        %v1116 = vpop.f32.mrf.mxu0
        %v1117 = vadd.f32 %v808, %v1116
        %v1118 = vpop.f32.mrf.mxu0
        %v1119 = vadd.f32 %v808, %v1118
        %1120 = vmatprep.mubr.f32.mxu0 0.0
        %1121 = vmatmul.mubr.f32.gmra.mxu0 %v910
        %v1122 = vpop.f32.mrf.mxu0
        %v1123 = vadd.f32 %v813, %v1122
        %v1124 = vpop.f32.mrf.mxu0
        %v1125 = vadd.f32 %v813, %v1124
        %1126 = vmatprep.mubr.f32.mxu0 0.0
        %1127 = vmatmul.mubr.f32.gmra.mxu0 %v913
        %v1128 = vpop.f32.mrf.mxu0
        %v1129 = vadd.f32 %v818, %v1128
        %v1130 = vpop.f32.mrf.mxu0
        %v1131 = vadd.f32 %v818, %v1130
        %1132 = vmatprep.mubr.f32.mxu0 0.0
        %1133 = vmatmul.mubr.f32.gmra.mxu0 %v916
        %v1134 = vpop.f32.mrf.mxu0
        %v1135 = vadd.f32 %v823, %v1134
        %v1136 = vpop.f32.mrf.mxu0
        %v1137 = vadd.f32 %v823, %v1136
        %1138 = vmatprep.mubr.f32.mxu0 0.0
        %1139 = vmatmul.mubr.f32.gmra.mxu0 %v919
        %v1140 = vpop.f32.mrf.mxu0
        %v1141 = vadd.f32 %v828, %v1140
        %v1142 = vpop.f32.mrf.mxu0
        %v1143 = vadd.f32 %v828, %v1142
        %1144 = vmatprep.mubr.f32.mxu0 0.0
        %1145 = vmatmul.mubr.f32.gmra.mxu0 %v922
        %v1146 = vpop.f32.mrf.mxu0
        %v1147 = vadd.f32 %v833, %v1146
        %v1148 = vpop.f32.mrf.mxu0
        %v1149 = vadd.f32 %v833, %v1148
        %1150 = vmatprep.mubr.f32.mxu0 0.0
        %1151 = vmatmul.mubr.f32.gmra.mxu0 %v925
        %v1152 = vpop.f32.mrf.mxu0
        %v1153 = vadd.f32 %v838, %v1152
        %v1154 = vpop.f32.mrf.mxu0
        %v1155 = vadd.f32 %v838, %v1154
        %1156 = vmatprep.mubr.f32.mxu0 0.0
        %1157 = vmatmul.mubr.f32.gmra.mxu0 %v928
        %v1158 = vpop.f32.mrf.mxu0
        %v1159 = vadd.f32 %v843, %v1158
        %v1160 = vpop.f32.mrf.mxu0
        %v1161 = vadd.f32 %v843, %v1160
        %1162 = vdwg.mxu0
        %v1163 = vmax.f32 %v997, 0.0
        %v1164 = vmax.f32 %v999, 0.0
        %v1165 = vmax.f32 %v1003, 0.0
        %v1166 = vmax.f32 %v1005, 0.0
        %v1167 = vmax.f32 %v1009, 0.0
        %v1168 = vmax.f32 %v1011, 0.0
        %v1169 = vmax.f32 %v1015, 0.0
        %v1170 = vmax.f32 %v1017, 0.0
        %v1171 = vmax.f32 %v1021, 0.0
        %v1172 = vmax.f32 %v1023, 0.0
        %v1173 = vmax.f32 %v1027, 0.0
        %v1174 = vmax.f32 %v1029, 0.0
        %v1175 = vmax.f32 %v1033, 0.0
        %v1176 = vmax.f32 %v1035, 0.0
        %v1177 = vmax.f32 %v1039, 0.0
        %v1178 = vmax.f32 %v1041, 0.0
        %v1179 = vmax.f32 %v1045, 0.0
        %v1180 = vmax.f32 %v1047, 0.0
        %v1181 = vmax.f32 %v1051, 0.0
        %v1182 = vmax.f32 %v1053, 0.0
        %v1183 = vmax.f32 %v1057, 0.0
        %v1184 = vmax.f32 %v1059, 0.0
        %v1185 = vmax.f32 %v1063, 0.0
        %v1186 = vmax.f32 %v1065, 0.0
        %v1187 = vmax.f32 %v1069, 0.0
        %v1188 = vmax.f32 %v1071, 0.0
        %v1189 = vmax.f32 %v1075, 0.0
        %v1190 = vmax.f32 %v1077, 0.0
        %v1191 = vmax.f32 %v1081, 0.0
        %v1192 = vmax.f32 %v1083, 0.0
        %v1193 = vmax.f32 %v1087, 0.0
        %v1194 = vmax.f32 %v1089, 0.0
        %v1195 = vmax.f32 %v1093, 0.0
        %v1196 = vmax.f32 %v1095, 0.0
        %v1197 = vmax.f32 %v1099, 0.0
        %v1198 = vmax.f32 %v1101, 0.0
        %v1199 = vmax.f32 %v1105, 0.0
        %v1200 = vmax.f32 %v1107, 0.0
        %v1201 = vmax.f32 %v1111, 0.0
        %v1202 = vmax.f32 %v1113, 0.0
        %v1203 = vmax.f32 %v1117, 0.0
        %v1204 = vmax.f32 %v1119, 0.0
        %v1205 = vmax.f32 %v1123, 0.0
        %v1206 = vmax.f32 %v1125, 0.0
        %v1207 = vmax.f32 %v1129, 0.0
        %v1208 = vmax.f32 %v1131, 0.0
        %v1209 = vmax.f32 %v1135, 0.0
        %v1210 = vmax.f32 %v1137, 0.0
        %v1211 = vmax.f32 %v1141, 0.0
        %v1212 = vmax.f32 %v1143, 0.0
        %v1213 = vmax.f32 %v1147, 0.0
        %v1214 = vmax.f32 %v1149, 0.0
        %v1215 = vmax.f32 %v1153, 0.0
        %v1216 = vmax.f32 %v1155, 0.0
        %v1217 = vmax.f32 %v1159, 0.0
        %v1218 = vmax.f32 %v1161, 0.0
        %v1219 = vld [vmem:[%s4] sm:$0x7f]
        %v1220 = vld [vmem:[%s4 + $0x8] sm:$0x7f]
        %vm1221 = vcmask 785408
        %v1223 = vsel %vm1221, %v1220, 0
        %1225 = vmatprep.subr.mxu0 %v1194
        %1226 = vmatpush1.msra.mxu0 %v1193
        %1227 = vmatprep.subr.mxu0 %v1192
        %1228 = vmatpush1.msra.mxu0 %v1191
        %1229 = vmatprep.subr.mxu0 %v1190
        %1230 = vmatpush1.msra.mxu0 %v1189
        %1231 = vmatprep.subr.mxu0 %v1188
        %1232 = vmatpush1.msra.mxu0 %v1187
        %1233 = vmatprep.subr.mxu0 %v1186
        %1234 = vmatpush1.msra.mxu0 %v1185
        %1235 = vmatprep.subr.mxu0 %v1184
        %1236 = vmatpush1.msra.mxu0 %v1183
        %1237 = vmatprep.subr.mxu0 %v1182
        %1238 = vmatpush1.msra.mxu0 %v1181
        %1239 = vmatprep.subr.mxu0 %v1180
        %1240 = vmatpush1.msra.mxu0 %v1179
        %1241 = vmatprep.subr.mxu0 %v1178
        %1242 = vmatpush1.msra.mxu0 %v1177
        %1243 = vmatprep.subr.mxu0 %v1176
        %1244 = vmatpush1.msra.mxu0 %v1175
        %1245 = vmatprep.subr.mxu0 %v1174
        %1246 = vmatpush1.msra.mxu0 %v1173
        %1247 = vmatprep.subr.mxu0 %v1172
        %1248 = vmatpush1.msra.mxu0 %v1171
        %1249 = vmatprep.subr.mxu0 %v1170
        %1250 = vmatpush1.msra.mxu0 %v1169
        %1251 = vmatprep.subr.mxu0 %v1168
        %1252 = vmatpush1.msra.mxu0 %v1167
        %1253 = vmatprep.subr.mxu0 %v1166
        %1254 = vmatpush1.msra.mxu0 %v1165
        %1255 = vmatprep.subr.mxu0 %v1164
        %1256 = vmatpush1.msra.mxu0 %v1163
        %1257 = vmatprep.subr.mxu0 0.0
        %1258 = vmatpush2.msra.mxu0 0.0
        %1259 = vmatprep.subr.mxu0 0.0
        %1260 = vmatpush2.msra.mxu0 0.0
        %1261 = vmatprep.subr.mxu0 0.0
        %1262 = vmatpush2.msra.mxu0 0.0
        %1263 = vmatprep.subr.mxu0 0.0
        %1264 = vmatpush2.msra.mxu0 0.0
        %1265 = vmatprep.subr.mxu0 %v1218
        %1266 = vmatpush2.msra.mxu0 %v1217
        %1267 = vmatprep.subr.mxu0 %v1216
        %1268 = vmatpush2.msra.mxu0 %v1215
        %1269 = vmatprep.subr.mxu0 %v1214
        %1270 = vmatpush2.msra.mxu0 %v1213
        %1271 = vmatprep.subr.mxu0 %v1212
        %1272 = vmatpush2.msra.mxu0 %v1211
        %1273 = vmatprep.subr.mxu0 %v1210
        %1274 = vmatpush2.msra.mxu0 %v1209
        %1275 = vmatprep.subr.mxu0 %v1208
        %1276 = vmatpush2.msra.mxu0 %v1207
        %1277 = vmatprep.subr.mxu0 %v1206
        %1278 = vmatpush2.msra.mxu0 %v1205
        %1279 = vmatprep.subr.mxu0 %v1204
        %1280 = vmatpush2.msra.mxu0 %v1203
        %1281 = vmatprep.subr.mxu0 %v1202
        %1282 = vmatpush2.msra.mxu0 %v1201
        %1283 = vmatprep.subr.mxu0 %v1200
        %1284 = vmatpush2.msra.mxu0 %v1199
        %1285 = vmatprep.subr.mxu0 %v1198
        %1286 = vmatpush2.msra.mxu0 %v1197
        %1287 = vmatprep.subr.mxu0 %v1196
        %1288 = vmatpush2.msra.mxu0 %v1195
        %1289 = vmatprep.mubr.f32.mxu0 %v1223
        %1290 = vmatmul.mubr.f32.gmra.mxu0 %v1219
        %v1291 = vpop.f32.mrf.mxu0
        %v1292 = vadd.f32 0.0, %v1291
        %v1293 = vpop.f32.mrf.mxu0
        %v1294 = vadd.f32 0.0, %v1293
        %1295 = vdwg.mxu0
        %vm1296 = vcmask 1046528
        %v1297 = vsel %vm1296, %v1292, -inf
        %v1298 = vrot.slane %v1297, 4
        %v1299 = vmax.f32 %v1297, %v1298
        %v1300 = vrot.slane %v1299, 2
        %v1301 = vmax.f32 %v1299, %v1300
        %v1302 = vrot.slane %v1301, 1
        %v1303 = vmax.f32 %v1301, %v1302
        %v1304 = vsel %vm1296, %v1294, -inf
        %v1305 = vrot.slane %v1304, 4
        %v1306 = vmax.f32 %v1304, %v1305
        %v1307 = vrot.slane %v1306, 2
        %v1308 = vmax.f32 %v1306, %v1307
        %v1309 = vrot.slane %v1308, 1
        %v1310 = vmax.f32 %v1308, %v1309
        %v1313 = vcombine.low %v1303, %v1310
        %v1315 = vunpack.c.l.s4 1966171168
        %v1316 = vunpack.c.0.s8 %v1315
        %v1317 = vlaneseq
        %v1318 = vshrl.u32 %v1317, 7
        %v1319 = vsub.s32 %v1316, %v1318
        %v1320 = vrot.slane %v1313, %v1319
        %v1322 = vunpack.c.l.s4 1966171168
        %v1323 = vunpack.c.0.s8 %v1322
        %v1324 = vlaneseq
        %v1325 = vshrl.u32 %v1324, 7
        %v1326 = vsub.s32 %v1323, %v1325
        %v1327 = vrot.slane %v1320, %v1326
        %v1329 = vlaneseq
        %vm1330 = vcmp.ge.s32.totalorder %v1329, 0
        %vm1331 = vcmp.lt.s32.totalorder %v1329, 256
        %vm1332 = vmand %vm1330, %vm1331
        %1333 = vst.msk [vmem:[%s248] sm:$0x3] %vm1332, %v1327
        %s1334 = sand.u32 %s137, 1
        %s1335 = scalar_lea.sflag [#allocation5], %s1334
        %s1336 = sand.u32 %s137, 1
        %s1337 = smul.addr %s1336, 2
        %s1338 = scalar_lea.vmem [#allocation4], %s1337
        // Predicated region
        $region64: #{tpu_custom_call.1} parent=58 // pred_check
          %p1339 = pneg %p147
        $region65: #{tpu_custom_call.1} parent=58 // pred_check_branch
          %1341 = sbr.rel (%p1339) target = $region67
        $region66: #{tpu_custom_call.1} parent=58 // pred_region
          %s1342 = smul.u32 2, %s19
          %s1344 = ssub.s32 32, 32
          %1345 = vsyncadd %s1335, %s1344
          %s1346 = smul.addr %s1342, 16
          %s1347 = scalar_lea.hbm %s5, %s1346
          %s1349 = sshll.u32 %s1338, 4
          %s1350 = int_to_ptr.vmem [resolvable:$true] %s1349
          %1352 = dma.vmem_to_hbm [thread:$0]  %s1350, 32, %s1347, %s1335
        $region67: #{tpu_custom_call.1} parent=58 // pred_fallthru
          _
      $region59: #{tpu_custom_call.1} parent=5 // pred_fallthru
        _
      %p1353 = scmp.le.s32.totalorder 2, %s14
      // Predicated region
      $region68: #{tpu_custom_call.1} parent=5 // pred_check
        %p1354 = pneg %p1353
      $region69: #{tpu_custom_call.1} parent=5 // pred_check_branch
        %1356 = sbr.rel (%p1354) target = $region71
      $region70: #{tpu_custom_call.1} parent=5 // pred_region
        %s1357 = ssub.s32 %s14, 2
        // Predicated region
        $region72: #{tpu_custom_call.1} parent=70 // pred_check
          %p1358 = pneg %p153
        $region73: #{tpu_custom_call.1} parent=70 // pred_check_branch
          %1360 = sbr.rel (%p1358) target = $region75
        $region74: #{tpu_custom_call.1} parent=70 // pred_region
          %s1361 = sand.u32 %s138, 1
          %s1362 = scalar_lea.sflag [#allocation5], %s1361
          %s1363 = sand.u32 %s138, 1
          %s1364 = smul.addr %s1363, 2
          %s1365 = scalar_lea.vmem [#allocation4], %s1364
          %1366 = dma.done %s1362, 32
        $region75: #{tpu_custom_call.1} parent=70 // pred_fallthru
          _
      $region71: #{tpu_custom_call.1} parent=5 // pred_fallthru
        _
    $region6: #{tpu_custom_call.1} parent=1 // loop_footer
      %s18 = sadd.s32 1, %s14
    $region7: #{tpu_custom_call.1} parent=1 // loop_footer_branch
      %13 = sbr.rel target = $region3
    $region8: #{tpu_custom_call.1} parent=1 // loop_exit
      _
    %1367 = vsyncpa [#allocation5], 1
    %s1368 = scalar_lea.sflag [#allocation5], 1
    %1369 = vsyncpa %s1368, 1

</llo_original>
